<compile_context>
chip_gen: v7x
topology: tpu7x:2x2x1
jax: 0.10.0
libtpu: 0.0.40
codegen_flags: <defaults>
</compile_context>

<pallas_src>
import math

import jax
import jax.numpy as jnp
from jax.experimental import pallas as pl
from jax.experimental.pallas import tpu as pltpu


def _proj_head_kernel(x_ref, w_ref, b_ref, o_ref):
    # x_ref: (tm, C_in), w_ref: (C_in, C_out) [resident], b_ref: (1, C_out) f32 [resident]
    y = jnp.dot(x_ref[...], w_ref[...], preferred_element_type=jnp.float32)
    y = y + b_ref[...]                       # f32 bias broadcast over points
    o_ref[...] = jnp.maximum(y, 0.0).astype(o_ref.dtype)


def _pick_tm(n, c_in, c_out, dtype_bytes):
    """Pick a point-tile size: as large as a conservative VMEM budget allows."""
    # Double-buffered input + output tiles; weight/bias are tiny and resident.
    budget = 8 * 1024 * 1024                    # headroom even vs v7x 32 MiB scoped default
    per_row = 2 * (c_in + c_out) * dtype_bytes
    tm = budget // max(per_row, 1)
    tm = max(256, min(4096, (tm // 256) * 256))
    # Keep at least 2 grid steps when N allows so v7x's two TensorCores both
    # get work on the parallel axis.
    if n > 512:
        half_up = ((n + 1) // 2 + 255) // 256 * 256
        tm = min(tm, max(256, half_up))
    return tm


def projection_head2(feats, weight, bias, *, tm=None, io_dtype=None):
    """relu(feats @ weight + bias) with a Pallas TPU kernel.

    feats : [N, C_in]
    weight: [C_in, C_out]
    bias  : [C_out]
    io_dtype: optional dtype (e.g. jnp.bfloat16) for feats/weight/output HBM
              traffic; accumulation and epilogue stay in f32.
    """
    n, c_in = feats.shape
    c_out = weight.shape[1]

    out_dtype = io_dtype if io_dtype is not None else feats.dtype
    if io_dtype is not None:
        feats = feats.astype(io_dtype)
        weight = weight.astype(io_dtype)
    bias2d = bias.reshape(1, c_out).astype(jnp.float32)

    dtype_bytes = jnp.dtype(feats.dtype).itemsize
    if tm is None:
        tm = _pick_tm(n, c_in, c_out, dtype_bytes)

    grid = (pl.cdiv(n, tm),)

    cost = pl.CostEstimate(
        flops=2 * n * c_in * c_out,
        transcendentals=0,
        bytes_accessed=dtype_bytes * (n * c_in + c_in * c_out)
        + jnp.dtype(out_dtype).itemsize * n * c_out
        + 4 * c_out,
    )

    return pl.pallas_call(
        _proj_head_kernel,
        out_shape=jax.ShapeDtypeStruct((n, c_out), out_dtype),
        grid_spec=pl.GridSpec(
            grid=grid,
            in_specs=[
                pl.BlockSpec((tm, c_in), lambda i: (i, 0)),
                pl.BlockSpec((c_in, c_out), lambda i: (0, 0)),
                pl.BlockSpec((1, c_out), lambda i: (0, 0)),
            ],
            out_specs=pl.BlockSpec((tm, c_out), lambda i: (i, 0)),
        ),
        compiler_params=pltpu.CompilerParams(
            dimension_semantics=("parallel",),
        ),
        cost_estimate=cost,
    )(feats, weight, bias2d)


def init_params(key, input_dim, output_dim):
    """Deterministic init mirroring the module's weight_initialization.

    ME.utils.kaiming_normal_(kernel, mode='fan_out', nonlinearity='relu')
      -> std = sqrt(2 / fan_out) = sqrt(2 / output_dim); bias zeros.
    """
    kw, _ = jax.random.split(key)
    std = math.sqrt(2.0 / output_dim)
    weight = std * jax.random.normal(kw, (input_dim, output_dim), dtype=jnp.float32)
    bias = jnp.zeros((output_dim,), dtype=jnp.float32)
    return weight, bias


if __name__ == "__main__":
    key = jax.random.PRNGKey(0)
    k_feat, k_param = jax.random.split(key)

    # Sparse point-cloud features: arbitrary (non-tile-multiple) point count.
    n_points, input_dim, output_dim = 3000, 32, 64

    feats = jax.random.normal(k_feat, (n_points, input_dim), dtype=jnp.float32)
    weight, bias = init_params(k_param, input_dim, output_dim)

    ref = jnp.maximum(feats @ weight + bias[None, :], 0.0)

    # f32 path: bit-faithful to the PyTorch module semantics.
    out_f32 = jax.block_until_ready(projection_head2(feats, weight, bias))
    assert out_f32.shape == (n_points, output_dim)
    assert jnp.allclose(out_f32, ref, atol=1e-5, rtol=1e-5)

    # bf16 I/O path: half the HBM traffic, f32 accumulation; looser tolerance.
    out_bf16 = jax.block_until_ready(
        projection_head2(feats, weight, bias, io_dtype=jnp.bfloat16)
    )
    assert out_bf16.dtype == jnp.bfloat16
    assert jnp.allclose(out_bf16.astype(jnp.float32), ref, atol=1e-1, rtol=1e-1)

    print("KERNEL_OK")
</pallas_src>

<mosaic_0001>
module attributes {stable_mosaic.version = 11 : i64} {
  func.func @_proj_head_kernel(%arg0: i32, %arg1: memref<1536x32xf32, #tpu.memory_space<vmem>>, %arg2: memref<32x64xf32, #tpu.memory_space<vmem>>, %arg3: memref<1x64xf32, #tpu.memory_space<vmem>>, %arg4: memref<1536x64xf32, #tpu.memory_space<vmem>>) attributes {dimension_semantics = [#tpu.dimension_semantics<parallel>], iteration_bounds = array<i64: 2>, scalar_prefetch = 0 : i64, scratch_operands = 0 : i64, tpu.core_type = #tpu.core_type<tc>, window_params = [{transform_indices = @transform_0, window_bounds = array<i64: 1536, 32>}, {pipeline_mode = #tpu.pipeline_mode<synchronous>, transform_indices = @transform_1, window_bounds = array<i64: 32, 64>}, {pipeline_mode = #tpu.pipeline_mode<synchronous>, transform_indices = @transform_2, window_bounds = array<i64: 1, 64>}, {transform_indices = @transform_3, window_bounds = array<i64: 1536, 64>}]} {
    %c0 = arith.constant 0 : index
    %c0_0 = arith.constant 0 : index
    %0 = vector.load %arg1[%c0, %c0_0] : memref<1536x32xf32, #tpu.memory_space<vmem>>, vector<1536x32xf32>
    %c0_1 = arith.constant 0 : index
    %c0_2 = arith.constant 0 : index
    %1 = vector.load %arg2[%c0_1, %c0_2] : memref<32x64xf32, #tpu.memory_space<vmem>>, vector<32x64xf32>
    %cst = arith.constant dense<0.000000e+00> : vector<1536x64xf32>
    %2 = tpu.matmul %0, %1, %cst {dimension_numbers = #tpu.dot_dimension_numbers<[1], [0], [0], [1], [0, 0, 1, 1], [], []>} : vector<1536x32xf32>, vector<32x64xf32>, vector<1536x64xf32> -> vector<1536x64xf32>
    %c0_3 = arith.constant 0 : index
    %c0_4 = arith.constant 0 : index
    %3 = vector.load %arg3[%c0_3, %c0_4] : memref<1x64xf32, #tpu.memory_space<vmem>>, vector<1x64xf32>
    %4 = vector.broadcast %3 : vector<1x64xf32> to vector<1536x64xf32>
    %5 = arith.addf %2, %4 : vector<1536x64xf32>
    %cst_5 = arith.constant 0.000000e+00 : f32
    %6 = vector.broadcast %cst_5 : f32 to vector<1536x64xf32>
    %7 = arith.maximumf %5, %6 : vector<1536x64xf32>
    %c0_6 = arith.constant 0 : index
    %c0_7 = arith.constant 0 : index
    %8 = vector.load %arg4[%c0_6, %c0_7] : memref<1536x64xf32, #tpu.memory_space<vmem>>, vector<1536x64xf32>
    tpu.vector_store %arg4[%c0_6, %c0_7], %7 {strides = array<i32>} : memref<1536x64xf32, #tpu.memory_space<vmem>>, vector<1536x64xf32>,
    return
  }
  func.func @transform_0(%arg0: i32) -> (i32, i32) {
    %c0_i32 = arith.constant 0 : i32
    %c0_i32_0 = arith.constant 0 : i32
    return %arg0, %c0_i32 : i32, i32
  }
  func.func @transform_1(%arg0: i32) -> (i32, i32) {
    %c0_i32 = arith.constant 0 : i32
    %c0_i32_0 = arith.constant 0 : i32
    %c0_i32_1 = arith.constant 0 : i32
    return %c0_i32, %c0_i32_0 : i32, i32
  }
  func.func @transform_2(%arg0: i32) -> (i32, i32) {
    %c0_i32 = arith.constant 0 : i32
    %c0_i32_0 = arith.constant 0 : i32
    %c0_i32_1 = arith.constant 0 : i32
    return %c0_i32, %c0_i32_0 : i32, i32
  }
  func.func @transform_3(%arg0: i32) -> (i32, i32) {
    %c0_i32 = arith.constant 0 : i32
    %c0_i32_0 = arith.constant 0 : i32
    return %arg0, %c0_i32 : i32, i32
  }
}

</mosaic_0001>

<llo_original>
// kernel: tpu_custom_call.1
$region0: #{tpu_custom_call.1}
  #allocation0 [shape = 'u32[]', space=smem, size = 0x4, offset = 0x4, fixed_abs, tag = 'smem constant byte address 0x4 - core index']
  #allocation1 [shape = 'u32[144,128]{1,0:T(1,128)}', space=vmem, size = 0x12000, scoped, tag = 'internal scratch']
  %s0 = inlined_call_operand.vmem [shape: f32[3000,32], index: 0, kind: input, shape index: {}]
  %s1 = inlined_call_operand.vmem [shape: f32[32,64], index: 1, kind: input, shape index: {}]
  %s2 = inlined_call_operand.vmem [shape: f32[1,64], index: 2, kind: input, shape index: {}]
  %s3 = inlined_call_operand.vmem [shape: f32[3000,64], index: 3, kind: output, shape index: {}]
  %s4 = sld [smem:[#allocation0]]
  $region93: #{tpu_custom_call.1} parent=0
    _
  %s6 = ssub.s32 1, %s4
  %s7 = scalar_select 0, %s6, %s4
  $region1: #{tpu_custom_call.1} parent=0
    #allocation2 [shape = 'u8[1572864]{0}', space=vmem, size = 0x180000, scoped, tag = 'output window, operand 0']
    loop: start=0, step=1, limit=4
    $region2: #{tpu_custom_call.1} parent=1 // loop_pre_header
      _
    $region3: #{tpu_custom_call.1} parent=1 // loop_header
      %s9 = sphi 0, %s13
      %p10 = scmp.ge.s32.totalorder %s9, 4
      %s19 = sphi 0, %s21
      %s22 = sphi 0, %s19
      %s23 = sphi 0, %s22
      %s39 = sphi 0, %s23
      %s43 = sphi 0, %s43
      %s45 = sphi 0, %s43
      %s46 = sphi 0, %s45
      %s60 = sphi 0, %s46
      %s64 = sphi 0, %s64
      %s66 = sphi 0, %s64
      %s67 = sphi 0, %s66
      %s81 = sphi 0, %s67
      %s87 = sphi 0, %s89
      %s90 = sphi 0, %s87
      %s91 = sphi 0, %s90
      %s107 = sphi 0, %s91
    $region4: #{tpu_custom_call.1} parent=1 // loop_header_branch
      %12 = sbr.rel (%p10) target = $region8
    $region5: #{tpu_custom_call.1} parent=1 // loop_body
      %s14 = ssub.s32 %s9, 1
      %s15 = ssub.s32 %s9, 2
      %s16 = sadd.s32 %s9, 1
      %s17 = ssub.s32 %s9, %s16
      %p18 = scmp.eq.s32.totalorder %s17, 0
      %s20 = sadd.s32 %s19, 1
      %s21 = scalar_select %p18, %s19, %s20
      %p24 = pneg %p18
      %p25 = scmp.eq.s32.totalorder %s9, 1
      %p26 = por %p24, %p25
      %p27 = scmp.ne.s32.totalorder %s19, %s22
      %p28 = scmp.eq.s32.totalorder %s9, 0
      %p29 = por %p27, %p28
      %p30 = scmp.ne.s32.totalorder %s19, %s22
      %p31 = scmp.eq.s32.totalorder %s14, 1
      %p32 = por %p30, %p31
      %p33 = scmp.ne.s32.totalorder %s22, %s23
      %p34 = scmp.eq.s32.totalorder %s14, 0
      %p35 = por %p33, %p34
      %p36 = scmp.ne.s32.totalorder %s22, %s23
      %p37 = scmp.eq.s32.totalorder %s15, 1
      %p38 = por %p36, %p37
      %p40 = scmp.ne.s32.totalorder %s23, %s39
      %p41 = scmp.eq.s32.totalorder %s15, 0
      %p42 = por %p40, %p41
      %s44 = sadd.s32 %s43, 1
      %p47 = scmp.eq.s32.totalorder %s9, 1
      %p48 = scmp.ne.s32.totalorder %s43, %s45
      %p49 = scmp.eq.s32.totalorder %s9, 0
      %p50 = por %p48, %p49
      %p51 = scmp.ne.s32.totalorder %s43, %s45
      %p52 = scmp.eq.s32.totalorder %s14, 1
      %p53 = por %p51, %p52
      %p54 = scmp.ne.s32.totalorder %s45, %s46
      %p55 = scmp.eq.s32.totalorder %s14, 0
      %p56 = por %p54, %p55
      %p57 = scmp.ne.s32.totalorder %s45, %s46
      %p58 = scmp.eq.s32.totalorder %s15, 1
      %p59 = por %p57, %p58
      %p61 = scmp.ne.s32.totalorder %s46, %s60
      %p62 = scmp.eq.s32.totalorder %s15, 0
      %p63 = por %p61, %p62
      %s65 = sadd.s32 %s64, 1
      %p68 = scmp.eq.s32.totalorder %s9, 1
      %p69 = scmp.ne.s32.totalorder %s64, %s66
      %p70 = scmp.eq.s32.totalorder %s9, 0
      %p71 = por %p69, %p70
      %p72 = scmp.ne.s32.totalorder %s64, %s66
      %p73 = scmp.eq.s32.totalorder %s14, 1
      %p74 = por %p72, %p73
      %p75 = scmp.ne.s32.totalorder %s66, %s67
      %p76 = scmp.eq.s32.totalorder %s14, 0
      %p77 = por %p75, %p76
      %p78 = scmp.ne.s32.totalorder %s66, %s67
      %p79 = scmp.eq.s32.totalorder %s15, 1
      %p80 = por %p78, %p79
      %p82 = scmp.ne.s32.totalorder %s67, %s81
      %p83 = scmp.eq.s32.totalorder %s15, 0
      %p84 = por %p82, %p83
      %s85 = ssub.s32 %s9, %s16
      %p86 = scmp.eq.s32.totalorder %s85, 0
      %s88 = sadd.s32 %s87, 1
      %s89 = scalar_select %p86, %s87, %s88
      %p92 = pneg %p86
      %p93 = scmp.eq.s32.totalorder %s9, 1
      %p94 = por %p92, %p93
      %p95 = scmp.ne.s32.totalorder %s87, %s90
      %p96 = scmp.eq.s32.totalorder %s9, 0
      %p97 = por %p95, %p96
      %p98 = scmp.ne.s32.totalorder %s87, %s90
      %p99 = scmp.eq.s32.totalorder %s14, 1
      %p100 = por %p98, %p99
      %p101 = scmp.ne.s32.totalorder %s90, %s91
      %p102 = scmp.eq.s32.totalorder %s14, 0
      %p103 = por %p101, %p102
      %p104 = scmp.ne.s32.totalorder %s90, %s91
      %p105 = scmp.eq.s32.totalorder %s15, 1
      %p106 = por %p104, %p105
      %p108 = scmp.ne.s32.totalorder %s91, %s107
      %p109 = scmp.eq.s32.totalorder %s15, 0
      %p110 = por %p108, %p109
      %p111 = scmp.le.s32.totalorder 1, %s9
      %p112 = scmp.lt.s32.totalorder %s9, 3
      %p113 = pnand %p111, %p112
      %p114 = pneg %p113
      // Predicated region
      $region9: #{tpu_custom_call.1} parent=5 // pred_check
        _
      $region10: #{tpu_custom_call.1} parent=5 // pred_check_branch
        %116 = sbr.rel (%p113) target = $region12
      $region11: #{tpu_custom_call.1} parent=5 // pred_region
        %s117 = ssub.s32 %s9, 1
        // Predicated region
        $region13: #{tpu_custom_call.1} parent=11 // pred_check
          %p118 = pneg %p56
        $region14: #{tpu_custom_call.1} parent=11 // pred_check_branch
          %120 = sbr.rel (%p118) target = $region16
        $region15: #{tpu_custom_call.1} parent=11 // pred_region
          _
        $region16: #{tpu_custom_call.1} parent=11 // pred_fallthru
          _
        // Predicated region
        $region17: #{tpu_custom_call.1} parent=11 // pred_check
          %p121 = pneg %p77
        $region18: #{tpu_custom_call.1} parent=11 // pred_check_branch
          %123 = sbr.rel (%p121) target = $region20
        $region19: #{tpu_custom_call.1} parent=11 // pred_region
          _
        $region20: #{tpu_custom_call.1} parent=11 // pred_fallthru
          _
      $region12: #{tpu_custom_call.1} parent=5 // pred_fallthru
        _
      %p124 = scmp.lt.s32.totalorder %s9, 2
      // Predicated region
      $region21: #{tpu_custom_call.1} parent=5 // pred_check
        %p125 = pneg %p124
      $region22: #{tpu_custom_call.1} parent=5 // pred_check_branch
        %127 = sbr.rel (%p125) target = $region24
      $region23: #{tpu_custom_call.1} parent=5 // pred_region
        // Predicated region
        $region25: #{tpu_custom_call.1} parent=23 // pred_check
          %p128 = pneg %p29
        $region26: #{tpu_custom_call.1} parent=23 // pred_check_branch
          %130 = sbr.rel (%p128) target = $region28
        $region27: #{tpu_custom_call.1} parent=23 // pred_region
          %s131 = smul.u32 192, %s9
          %s132 = ssub.s32 375, %s131
          %p133 = scmp.lt.s32.totalorder %s132, 192
          %s134 = scalar_select %p133, %s132, 192
          %s135 = smul.u32 128, %s134
          %p136 = scmp.lt.s32.totalorder %s131, 374
          %s137 = scalar_select %p136, %s131, 374
          %s138 = smul.addr %s137, 8
          %s139 = scalar_lea.vmem %s0, %s138
          %s140 = smul.u32 192, %s9
          %s141 = ssub.s32 375, %s140
          %p142 = scmp.lt.s32.totalorder %s141, 192
          %s143 = scalar_select %p142, %s141, 192
          %s144 = smul.u32 128, %s143
        $region28: #{tpu_custom_call.1} parent=23 // pred_fallthru
          _
      $region24: #{tpu_custom_call.1} parent=5 // pred_fallthru
        _
      %p145 = scmp.le.s32.totalorder 1, %s9
      %p146 = scmp.lt.s32.totalorder %s9, 3
      %p147 = pnand %p145, %p146
      %p148 = pneg %p147
      // Predicated region
      $region29: #{tpu_custom_call.1} parent=5 // pred_check
        _
      $region30: #{tpu_custom_call.1} parent=5 // pred_check_branch
        %150 = sbr.rel (%p147) target = $region32
      $region31: #{tpu_custom_call.1} parent=5 // pred_region
        %s151 = ssub.s32 %s9, 1
        %s152 = smul.u32 192, %s14
        %s153 = ssub.s32 375, %s152
        %p154 = scmp.lt.s32.totalorder %s153, 192
        %s155 = scalar_select %p154, %s153, 192
        %s156 = smul.u32 128, %s155
        %p157 = scmp.lt.s32.totalorder %s152, 374
        %s158 = scalar_select %p157, %s152, 374
        %s159 = smul.addr %s158, 8
        %s160 = scalar_lea.vmem %s0, %s159
        %p161 = pneg %p35
        %p162 = pneg %p32
        %p163 = pneg %p56
        %p164 = pneg %p53
        %p165 = pneg %p77
        %p166 = pneg %p74
        %p167 = pneg %p103
        %p168 = pneg %p100
        %s169 = sand.u32 %s90, 1
        %s170 = sand.u32 %s90, 1
        %s171 = smul.addr %s170, 1536
        %s172 = scalar_lea.vmem [#allocation2], %s171
        %s173 = smul.u32 192, %s14
        %s174 = ssub.s32 375, %s173
        %p175 = scmp.lt.s32.totalorder %s174, 192
        %s176 = scalar_select %p175, %s174, 192
        %s177 = smul.u32 128, %s176
        %p178 = scmp.lt.s32.totalorder %s173, 374
        %s179 = scalar_select %p178, %s173, 374
        %s180 = smul.addr %s179, 8
        %s181 = scalar_lea.vmem %s0, %s180
        %s182 = smul.u32 192, %s14
        %s183 = ssub.s32 375, %s182
        %p184 = scmp.lt.s32.totalorder %s183, 192
        %s185 = scalar_select %p184, %s183, 192
        %s186 = smul.u32 128, %s185
        %s187 = smul.u32 192, %s14
        %s188 = ssub.s32 375, %s187
        %p189 = scmp.lt.s32.totalorder %s188, 192
        %s190 = scalar_select %p189, %s188, 192
        %s191 = smul.u32 128, %s190
        %v192 = vld [vmem:[%s181] sm:$0xff]
        %v193 = vld [vmem:[%s181 + $0x8] sm:$0xff]
        %v194 = vld [vmem:[%s181 + $0x10] sm:$0xff]
        %v195 = vld [vmem:[%s181 + $0x18] sm:$0xff]
        %v196 = vld [vmem:[%s181 + $0x20] sm:$0xff]
        %v197 = vld [vmem:[%s181 + $0x28] sm:$0xff]
        %v198 = vld [vmem:[%s181 + $0x30] sm:$0xff]
        %v199 = vld [vmem:[%s181 + $0x38] sm:$0xff]
        %v200 = vld [vmem:[%s181 + $0x40] sm:$0xff]
        %v201 = vld [vmem:[%s181 + $0x48] sm:$0xff]
        %v202 = vld [vmem:[%s181 + $0x50] sm:$0xff]
        %v203 = vld [vmem:[%s181 + $0x58] sm:$0xff]
        %v204 = vld [vmem:[%s181 + $0x60] sm:$0xff]
        %v205 = vld [vmem:[%s181 + $0x68] sm:$0xff]
        %v206 = vld [vmem:[%s181 + $0x70] sm:$0xff]
        %v207 = vld [vmem:[%s181 + $0x78] sm:$0xff]
        %v208 = vld [vmem:[%s181 + $0x80] sm:$0xff]
        %v209 = vld [vmem:[%s181 + $0x88] sm:$0xff]
        %v210 = vld [vmem:[%s181 + $0x90] sm:$0xff]
        %v211 = vld [vmem:[%s181 + $0x98] sm:$0xff]
        %v212 = vld [vmem:[%s181 + $0xa0] sm:$0xff]
        %v213 = vld [vmem:[%s181 + $0xa8] sm:$0xff]
        %v214 = vld [vmem:[%s181 + $0xb0] sm:$0xff]
        %v215 = vld [vmem:[%s181 + $0xb8] sm:$0xff]
        %v216 = vld [vmem:[%s181 + $0xc0] sm:$0xff]
        %v217 = vld [vmem:[%s181 + $0xc8] sm:$0xff]
        %v218 = vld [vmem:[%s181 + $0xd0] sm:$0xff]
        %v219 = vld [vmem:[%s181 + $0xd8] sm:$0xff]
        %v220 = vld [vmem:[%s181 + $0xe0] sm:$0xff]
        %v221 = vld [vmem:[%s181 + $0xe8] sm:$0xff]
        %v222 = vld [vmem:[%s181 + $0xf0] sm:$0xff]
        %v223 = vld [vmem:[%s181 + $0xf8] sm:$0xff]
        %v224 = vld [vmem:[%s181 + $0x100] sm:$0xff]
        %v225 = vld [vmem:[%s181 + $0x108] sm:$0xff]
        %v226 = vld [vmem:[%s181 + $0x110] sm:$0xff]
        %v227 = vld [vmem:[%s181 + $0x118] sm:$0xff]
        %v228 = vld [vmem:[%s181 + $0x120] sm:$0xff]
        %v229 = vld [vmem:[%s181 + $0x128] sm:$0xff]
        %v230 = vld [vmem:[%s181 + $0x130] sm:$0xff]
        %v231 = vld [vmem:[%s181 + $0x138] sm:$0xff]
        %v232 = vld [vmem:[%s181 + $0x140] sm:$0xff]
        %v233 = vld [vmem:[%s181 + $0x148] sm:$0xff]
        %v234 = vld [vmem:[%s181 + $0x150] sm:$0xff]
        %v235 = vld [vmem:[%s181 + $0x158] sm:$0xff]
        %v236 = vld [vmem:[%s181 + $0x160] sm:$0xff]
        %v237 = vld [vmem:[%s181 + $0x168] sm:$0xff]
        %v238 = vld [vmem:[%s181 + $0x170] sm:$0xff]
        %v239 = vld [vmem:[%s181 + $0x178] sm:$0xff]
        %v240 = vld [vmem:[%s181 + $0x180] sm:$0xff]
        %v241 = vld [vmem:[%s181 + $0x188] sm:$0xff]
        %v242 = vld [vmem:[%s181 + $0x190] sm:$0xff]
        %v243 = vld [vmem:[%s181 + $0x198] sm:$0xff]
        %v244 = vld [vmem:[%s181 + $0x1a0] sm:$0xff]
        %v245 = vld [vmem:[%s181 + $0x1a8] sm:$0xff]
        %v246 = vld [vmem:[%s181 + $0x1b0] sm:$0xff]
        %v247 = vld [vmem:[%s181 + $0x1b8] sm:$0xff]
        %v248 = vld [vmem:[%s181 + $0x1c0] sm:$0xff]
        %v249 = vld [vmem:[%s181 + $0x1c8] sm:$0xff]
        %v250 = vld [vmem:[%s181 + $0x1d0] sm:$0xff]
        %v251 = vld [vmem:[%s181 + $0x1d8] sm:$0xff]
        %v252 = vld [vmem:[%s181 + $0x1e0] sm:$0xff]
        %v253 = vld [vmem:[%s181 + $0x1e8] sm:$0xff]
        %v254 = vld [vmem:[%s181 + $0x1f0] sm:$0xff]
        %v255 = vld [vmem:[%s181 + $0x1f8] sm:$0xff]
        %v256 = vld [vmem:[%s181 + $0x200] sm:$0xff]
        %v257 = vld [vmem:[%s181 + $0x208] sm:$0xff]
        %v258 = vld [vmem:[%s181 + $0x210] sm:$0xff]
        %v259 = vld [vmem:[%s181 + $0x218] sm:$0xff]
        %v260 = vld [vmem:[%s181 + $0x220] sm:$0xff]
        %v261 = vld [vmem:[%s181 + $0x228] sm:$0xff]
        %v262 = vld [vmem:[%s181 + $0x230] sm:$0xff]
        %v263 = vld [vmem:[%s181 + $0x238] sm:$0xff]
        %v264 = vld [vmem:[%s181 + $0x240] sm:$0xff]
        %v265 = vld [vmem:[%s181 + $0x248] sm:$0xff]
        %v266 = vld [vmem:[%s181 + $0x250] sm:$0xff]
        %v267 = vld [vmem:[%s181 + $0x258] sm:$0xff]
        %v268 = vld [vmem:[%s181 + $0x260] sm:$0xff]
        %v269 = vld [vmem:[%s181 + $0x268] sm:$0xff]
        %v270 = vld [vmem:[%s181 + $0x270] sm:$0xff]
        %v271 = vld [vmem:[%s181 + $0x278] sm:$0xff]
        %v272 = vld [vmem:[%s181 + $0x280] sm:$0xff]
        %v273 = vld [vmem:[%s181 + $0x288] sm:$0xff]
        %v274 = vld [vmem:[%s181 + $0x290] sm:$0xff]
        %v275 = vld [vmem:[%s181 + $0x298] sm:$0xff]
        %v276 = vld [vmem:[%s181 + $0x2a0] sm:$0xff]
        %v277 = vld [vmem:[%s181 + $0x2a8] sm:$0xff]
        %v278 = vld [vmem:[%s181 + $0x2b0] sm:$0xff]
        %v279 = vld [vmem:[%s181 + $0x2b8] sm:$0xff]
        %v280 = vld [vmem:[%s181 + $0x2c0] sm:$0xff]
        %v281 = vld [vmem:[%s181 + $0x2c8] sm:$0xff]
        %v282 = vld [vmem:[%s181 + $0x2d0] sm:$0xff]
        %v283 = vld [vmem:[%s181 + $0x2d8] sm:$0xff]
        %v284 = vld [vmem:[%s181 + $0x2e0] sm:$0xff]
        %v285 = vld [vmem:[%s181 + $0x2e8] sm:$0xff]
        %v286 = vld [vmem:[%s181 + $0x2f0] sm:$0xff]
        %v287 = vld [vmem:[%s181 + $0x2f8] sm:$0xff]
        %v288 = vld [vmem:[%s181 + $0x300] sm:$0xff]
        %v289 = vld [vmem:[%s181 + $0x308] sm:$0xff]
        %v290 = vld [vmem:[%s181 + $0x310] sm:$0xff]
        %v291 = vld [vmem:[%s181 + $0x318] sm:$0xff]
        %v292 = vld [vmem:[%s181 + $0x320] sm:$0xff]
        %v293 = vld [vmem:[%s181 + $0x328] sm:$0xff]
        %v294 = vld [vmem:[%s181 + $0x330] sm:$0xff]
        %v295 = vld [vmem:[%s181 + $0x338] sm:$0xff]
        %v296 = vld [vmem:[%s181 + $0x340] sm:$0xff]
        %v297 = vld [vmem:[%s181 + $0x348] sm:$0xff]
        %v298 = vld [vmem:[%s181 + $0x350] sm:$0xff]
        %v299 = vld [vmem:[%s181 + $0x358] sm:$0xff]
        %v300 = vld [vmem:[%s181 + $0x360] sm:$0xff]
        %v301 = vld [vmem:[%s181 + $0x368] sm:$0xff]
        %v302 = vld [vmem:[%s181 + $0x370] sm:$0xff]
        %v303 = vld [vmem:[%s181 + $0x378] sm:$0xff]
        %v304 = vld [vmem:[%s181 + $0x380] sm:$0xff]
        %v305 = vld [vmem:[%s181 + $0x388] sm:$0xff]
        %v306 = vld [vmem:[%s181 + $0x390] sm:$0xff]
        %v307 = vld [vmem:[%s181 + $0x398] sm:$0xff]
        %v308 = vld [vmem:[%s181 + $0x3a0] sm:$0xff]
        %v309 = vld [vmem:[%s181 + $0x3a8] sm:$0xff]
        %v310 = vld [vmem:[%s181 + $0x3b0] sm:$0xff]
        %v311 = vld [vmem:[%s181 + $0x3b8] sm:$0xff]
        %v312 = vld [vmem:[%s181 + $0x3c0] sm:$0xff]
        %v313 = vld [vmem:[%s181 + $0x3c8] sm:$0xff]
        %v314 = vld [vmem:[%s181 + $0x3d0] sm:$0xff]
        %v315 = vld [vmem:[%s181 + $0x3d8] sm:$0xff]
        %v316 = vld [vmem:[%s181 + $0x3e0] sm:$0xff]
        %v317 = vld [vmem:[%s181 + $0x3e8] sm:$0xff]
        %v318 = vld [vmem:[%s181 + $0x3f0] sm:$0xff]
        %v319 = vld [vmem:[%s181 + $0x3f8] sm:$0xff]
        %v320 = vld [vmem:[%s181 + $0x400] sm:$0xff]
        %v321 = vld [vmem:[%s181 + $0x408] sm:$0xff]
        %v322 = vld [vmem:[%s181 + $0x410] sm:$0xff]
        %v323 = vld [vmem:[%s181 + $0x418] sm:$0xff]
        %v324 = vld [vmem:[%s181 + $0x420] sm:$0xff]
        %v325 = vld [vmem:[%s181 + $0x428] sm:$0xff]
        %v326 = vld [vmem:[%s181 + $0x430] sm:$0xff]
        %v327 = vld [vmem:[%s181 + $0x438] sm:$0xff]
        %v328 = vld [vmem:[%s181 + $0x440] sm:$0xff]
        %v329 = vld [vmem:[%s181 + $0x448] sm:$0xff]
        %v330 = vld [vmem:[%s181 + $0x450] sm:$0xff]
        %v331 = vld [vmem:[%s181 + $0x458] sm:$0xff]
        %v332 = vld [vmem:[%s181 + $0x460] sm:$0xff]
        %v333 = vld [vmem:[%s181 + $0x468] sm:$0xff]
        %v334 = vld [vmem:[%s181 + $0x470] sm:$0xff]
        %v335 = vld [vmem:[%s181 + $0x478] sm:$0xff]
        %v336 = vld [vmem:[%s181 + $0x480] sm:$0xff]
        %v337 = vld [vmem:[%s181 + $0x488] sm:$0xff]
        %v338 = vld [vmem:[%s181 + $0x490] sm:$0xff]
        %v339 = vld [vmem:[%s181 + $0x498] sm:$0xff]
        %v340 = vld [vmem:[%s181 + $0x4a0] sm:$0xff]
        %v341 = vld [vmem:[%s181 + $0x4a8] sm:$0xff]
        %v342 = vld [vmem:[%s181 + $0x4b0] sm:$0xff]
        %v343 = vld [vmem:[%s181 + $0x4b8] sm:$0xff]
        %v344 = vld [vmem:[%s181 + $0x4c0] sm:$0xff]
        %v345 = vld [vmem:[%s181 + $0x4c8] sm:$0xff]
        %v346 = vld [vmem:[%s181 + $0x4d0] sm:$0xff]
        %v347 = vld [vmem:[%s181 + $0x4d8] sm:$0xff]
        %v348 = vld [vmem:[%s181 + $0x4e0] sm:$0xff]
        %v349 = vld [vmem:[%s181 + $0x4e8] sm:$0xff]
        %v350 = vld [vmem:[%s181 + $0x4f0] sm:$0xff]
        %v351 = vld [vmem:[%s181 + $0x4f8] sm:$0xff]
        %v352 = vld [vmem:[%s181 + $0x500] sm:$0xff]
        %v353 = vld [vmem:[%s181 + $0x508] sm:$0xff]
        %v354 = vld [vmem:[%s181 + $0x510] sm:$0xff]
        %v355 = vld [vmem:[%s181 + $0x518] sm:$0xff]
        %v356 = vld [vmem:[%s181 + $0x520] sm:$0xff]
        %v357 = vld [vmem:[%s181 + $0x528] sm:$0xff]
        %v358 = vld [vmem:[%s181 + $0x530] sm:$0xff]
        %v359 = vld [vmem:[%s181 + $0x538] sm:$0xff]
        %v360 = vld [vmem:[%s181 + $0x540] sm:$0xff]
        %v361 = vld [vmem:[%s181 + $0x548] sm:$0xff]
        %v362 = vld [vmem:[%s181 + $0x550] sm:$0xff]
        %v363 = vld [vmem:[%s181 + $0x558] sm:$0xff]
        %v364 = vld [vmem:[%s181 + $0x560] sm:$0xff]
        %v365 = vld [vmem:[%s181 + $0x568] sm:$0xff]
        %v366 = vld [vmem:[%s181 + $0x570] sm:$0xff]
        %v367 = vld [vmem:[%s181 + $0x578] sm:$0xff]
        %v368 = vld [vmem:[%s181 + $0x580] sm:$0xff]
        %v369 = vld [vmem:[%s181 + $0x588] sm:$0xff]
        %v370 = vld [vmem:[%s181 + $0x590] sm:$0xff]
        %v371 = vld [vmem:[%s181 + $0x598] sm:$0xff]
        %v372 = vld [vmem:[%s181 + $0x5a0] sm:$0xff]
        %v373 = vld [vmem:[%s181 + $0x5a8] sm:$0xff]
        %v374 = vld [vmem:[%s181 + $0x5b0] sm:$0xff]
        %v375 = vld [vmem:[%s181 + $0x5b8] sm:$0xff]
        %v376 = vld [vmem:[%s181 + $0x5c0] sm:$0xff]
        %v377 = vld [vmem:[%s181 + $0x5c8] sm:$0xff]
        %v378 = vld [vmem:[%s181 + $0x5d0] sm:$0xff]
        %v379 = vld [vmem:[%s181 + $0x5d8] sm:$0xff]
        %v380 = vld [vmem:[%s181 + $0x5e0] sm:$0xff]
        %v381 = vld [vmem:[%s181 + $0x5e8] sm:$0xff]
        %v382 = vld [vmem:[%s181 + $0x5f0] sm:$0xff]
        %v383 = vld [vmem:[%s181 + $0x5f8] sm:$0xff]
        %v384 = vld [vmem:[%s1] sm:$0xff]
        %v385 = vld [vmem:[%s1 + $0x8] sm:$0xff]
        %v386 = vld [vmem:[%s1 + $0x10] sm:$0xff]
        %v387 = vld [vmem:[%s1 + $0x18] sm:$0xff]
        %v388 = vld [vmem:[%s2] sm:$0x1]
        %v390 = vlaneseq
        %v391 = vshrl.u32 %v390, 7
        %v392 = vsub.s32 0, %v391
        %v393 = vrot.slane %v388, %v392
        %vm395 = vcmask 261120
        %v397 = vsel %vm395, %v192, 0
        %v400 = vsel %vm395, %v193, 0
        %v403 = vsel %vm395, %v194, 0
        %v406 = vsel %vm395, %v195, 0
        %v409 = vsel %vm395, %v196, 0
        %v412 = vsel %vm395, %v197, 0
        %v415 = vsel %vm395, %v198, 0
        %v418 = vsel %vm395, %v199, 0
        %v421 = vsel %vm395, %v200, 0
        %v424 = vsel %vm395, %v201, 0
        %v427 = vsel %vm395, %v202, 0
        %v430 = vsel %vm395, %v203, 0
        %v433 = vsel %vm395, %v204, 0
        %v436 = vsel %vm395, %v205, 0
        %v439 = vsel %vm395, %v206, 0
        %v442 = vsel %vm395, %v207, 0
        %v445 = vsel %vm395, %v208, 0
        %v448 = vsel %vm395, %v209, 0
        %v451 = vsel %vm395, %v210, 0
        %v454 = vsel %vm395, %v211, 0
        %v457 = vsel %vm395, %v212, 0
        %v460 = vsel %vm395, %v213, 0
        %v463 = vsel %vm395, %v214, 0
        %v466 = vsel %vm395, %v215, 0
        %v469 = vsel %vm395, %v216, 0
        %v472 = vsel %vm395, %v217, 0
        %v475 = vsel %vm395, %v218, 0
        %v478 = vsel %vm395, %v219, 0
        %v481 = vsel %vm395, %v220, 0
        %v484 = vsel %vm395, %v221, 0
        %v487 = vsel %vm395, %v222, 0
        %v490 = vsel %vm395, %v223, 0
        %v493 = vsel %vm395, %v224, 0
        %v496 = vsel %vm395, %v225, 0
        %v499 = vsel %vm395, %v226, 0
        %v502 = vsel %vm395, %v227, 0
        %v505 = vsel %vm395, %v228, 0
        %v508 = vsel %vm395, %v229, 0
        %v511 = vsel %vm395, %v230, 0
        %v514 = vsel %vm395, %v231, 0
        %v517 = vsel %vm395, %v232, 0
        %v520 = vsel %vm395, %v233, 0
        %v523 = vsel %vm395, %v234, 0
        %v526 = vsel %vm395, %v235, 0
        %v529 = vsel %vm395, %v236, 0
        %v532 = vsel %vm395, %v237, 0
        %v535 = vsel %vm395, %v238, 0
        %v538 = vsel %vm395, %v239, 0
        %v541 = vsel %vm395, %v240, 0
        %v544 = vsel %vm395, %v241, 0
        %v547 = vsel %vm395, %v242, 0
        %v550 = vsel %vm395, %v243, 0
        %v553 = vsel %vm395, %v244, 0
        %v556 = vsel %vm395, %v245, 0
        %v559 = vsel %vm395, %v246, 0
        %v562 = vsel %vm395, %v247, 0
        %v565 = vsel %vm395, %v248, 0
        %v568 = vsel %vm395, %v249, 0
        %v571 = vsel %vm395, %v250, 0
        %v574 = vsel %vm395, %v251, 0
        %v577 = vsel %vm395, %v252, 0
        %v580 = vsel %vm395, %v253, 0
        %v583 = vsel %vm395, %v254, 0
        %v586 = vsel %vm395, %v255, 0
        %v589 = vsel %vm395, %v256, 0
        %v592 = vsel %vm395, %v257, 0
        %v595 = vsel %vm395, %v258, 0
        %v598 = vsel %vm395, %v259, 0
        %v601 = vsel %vm395, %v260, 0
        %v604 = vsel %vm395, %v261, 0
        %v607 = vsel %vm395, %v262, 0
        %v610 = vsel %vm395, %v263, 0
        %v613 = vsel %vm395, %v264, 0
        %v616 = vsel %vm395, %v265, 0
        %v619 = vsel %vm395, %v266, 0
        %v622 = vsel %vm395, %v267, 0
        %v625 = vsel %vm395, %v268, 0
        %v628 = vsel %vm395, %v269, 0
        %v631 = vsel %vm395, %v270, 0
        %v634 = vsel %vm395, %v271, 0
        %v637 = vsel %vm395, %v272, 0
        %v640 = vsel %vm395, %v273, 0
        %v643 = vsel %vm395, %v274, 0
        %v646 = vsel %vm395, %v275, 0
        %v649 = vsel %vm395, %v276, 0
        %v652 = vsel %vm395, %v277, 0
        %v655 = vsel %vm395, %v278, 0
        %v658 = vsel %vm395, %v279, 0
        %v661 = vsel %vm395, %v280, 0
        %v664 = vsel %vm395, %v281, 0
        %v667 = vsel %vm395, %v282, 0
        %v670 = vsel %vm395, %v283, 0
        %v673 = vsel %vm395, %v284, 0
        %v676 = vsel %vm395, %v285, 0
        %v679 = vsel %vm395, %v286, 0
        %v682 = vsel %vm395, %v287, 0
        %v685 = vsel %vm395, %v288, 0
        %v688 = vsel %vm395, %v289, 0
        %v691 = vsel %vm395, %v290, 0
        %v694 = vsel %vm395, %v291, 0
        %v697 = vsel %vm395, %v292, 0
        %v700 = vsel %vm395, %v293, 0
        %v703 = vsel %vm395, %v294, 0
        %v706 = vsel %vm395, %v295, 0
        %v709 = vsel %vm395, %v296, 0
        %v712 = vsel %vm395, %v297, 0
        %v715 = vsel %vm395, %v298, 0
        %v718 = vsel %vm395, %v299, 0
        %v721 = vsel %vm395, %v300, 0
        %v724 = vsel %vm395, %v301, 0
        %v727 = vsel %vm395, %v302, 0
        %v730 = vsel %vm395, %v303, 0
        %v733 = vsel %vm395, %v304, 0
        %v736 = vsel %vm395, %v305, 0
        %v739 = vsel %vm395, %v306, 0
        %v742 = vsel %vm395, %v307, 0
        %v745 = vsel %vm395, %v308, 0
        %v748 = vsel %vm395, %v309, 0
        %v751 = vsel %vm395, %v310, 0
        %v754 = vsel %vm395, %v311, 0
        %v757 = vsel %vm395, %v312, 0
        %v760 = vsel %vm395, %v313, 0
        %v763 = vsel %vm395, %v314, 0
        %v766 = vsel %vm395, %v315, 0
        %v769 = vsel %vm395, %v316, 0
        %v772 = vsel %vm395, %v317, 0
        %v775 = vsel %vm395, %v318, 0
        %v778 = vsel %vm395, %v319, 0
        %v781 = vsel %vm395, %v320, 0
        %v784 = vsel %vm395, %v321, 0
        %v787 = vsel %vm395, %v322, 0
        %v790 = vsel %vm395, %v323, 0
        %v793 = vsel %vm395, %v324, 0
        %v796 = vsel %vm395, %v325, 0
        %v799 = vsel %vm395, %v326, 0
        %v802 = vsel %vm395, %v327, 0
        %v805 = vsel %vm395, %v328, 0
        %v808 = vsel %vm395, %v329, 0
        %v811 = vsel %vm395, %v330, 0
        %v814 = vsel %vm395, %v331, 0
        %v817 = vsel %vm395, %v332, 0
        %v820 = vsel %vm395, %v333, 0
        %v823 = vsel %vm395, %v334, 0
        %v826 = vsel %vm395, %v335, 0
        %v829 = vsel %vm395, %v336, 0
        %v832 = vsel %vm395, %v337, 0
        %v835 = vsel %vm395, %v338, 0
        %v838 = vsel %vm395, %v339, 0
        %v841 = vsel %vm395, %v340, 0
        %v844 = vsel %vm395, %v341, 0
        %v847 = vsel %vm395, %v342, 0
        %v850 = vsel %vm395, %v343, 0
        %v853 = vsel %vm395, %v344, 0
        %v856 = vsel %vm395, %v345, 0
        %v859 = vsel %vm395, %v346, 0
        %v862 = vsel %vm395, %v347, 0
        %v865 = vsel %vm395, %v348, 0
        %v868 = vsel %vm395, %v349, 0
        %v871 = vsel %vm395, %v350, 0
        %v874 = vsel %vm395, %v351, 0
        %v877 = vsel %vm395, %v352, 0
        %v880 = vsel %vm395, %v353, 0
        %v883 = vsel %vm395, %v354, 0
        %v886 = vsel %vm395, %v355, 0
        %v889 = vsel %vm395, %v356, 0
        %v892 = vsel %vm395, %v357, 0
        %v895 = vsel %vm395, %v358, 0
        %v898 = vsel %vm395, %v359, 0
        %v901 = vsel %vm395, %v360, 0
        %v904 = vsel %vm395, %v361, 0
        %v907 = vsel %vm395, %v362, 0
        %v910 = vsel %vm395, %v363, 0
        %v913 = vsel %vm395, %v364, 0
        %v916 = vsel %vm395, %v365, 0
        %v919 = vsel %vm395, %v366, 0
        %v922 = vsel %vm395, %v367, 0
        %v925 = vsel %vm395, %v368, 0
        %v928 = vsel %vm395, %v369, 0
        %v931 = vsel %vm395, %v370, 0
        %v934 = vsel %vm395, %v371, 0
        %v937 = vsel %vm395, %v372, 0
        %v940 = vsel %vm395, %v373, 0
        %v943 = vsel %vm395, %v374, 0
        %v946 = vsel %vm395, %v375, 0
        %v949 = vsel %vm395, %v376, 0
        %v952 = vsel %vm395, %v377, 0
        %v955 = vsel %vm395, %v378, 0
        %v958 = vsel %vm395, %v379, 0
        %v961 = vsel %vm395, %v380, 0
        %v964 = vsel %vm395, %v381, 0
        %v967 = vsel %vm395, %v382, 0
        %v970 = vsel %vm395, %v383, 0
        %972 = vmatprep.subr.mxu0 0.0
        %973 = vmatpush1.msra.mxu0 %v384
        %974 = vmatprep.subr.mxu0 0.0
        %975 = vmatpush1.msra.mxu0 %v385
        %976 = vmatprep.subr.mxu0 0.0
        %977 = vmatpush1.msra.mxu0 %v386
        %978 = vmatprep.subr.mxu0 0.0
        %979 = vmatpush1.msra.mxu0 %v387
        %980 = vmatprep.subr.mxu0 0.0
        %981 = vmatpush1.msra.mxu0 0.0
        %982 = vmatprep.subr.mxu0 0.0
        %983 = vmatpush1.msra.mxu0 0.0
        %984 = vmatprep.subr.mxu0 0.0
        %985 = vmatpush1.msra.mxu0 0.0
        %986 = vmatprep.subr.mxu0 0.0
        %987 = vmatpush1.msra.mxu0 0.0
        %988 = vmatprep.subr.mxu0 0.0
        %989 = vmatpush1.msra.mxu0 0.0
        %990 = vmatprep.subr.mxu0 0.0
        %991 = vmatpush1.msra.mxu0 0.0
        %992 = vmatprep.subr.mxu0 0.0
        %993 = vmatpush1.msra.mxu0 0.0
        %994 = vmatprep.subr.mxu0 0.0
        %995 = vmatpush1.msra.mxu0 0.0
        %996 = vmatprep.subr.mxu0 0.0
        %997 = vmatpush1.msra.mxu0 0.0
        %998 = vmatprep.subr.mxu0 0.0
        %999 = vmatpush1.msra.mxu0 0.0
        %1000 = vmatprep.subr.mxu0 0.0
        %1001 = vmatpush1.msra.mxu0 0.0
        %1002 = vmatprep.subr.mxu0 0.0
        %1003 = vmatpush1.msra.mxu0 0.0
        %1004 = vmatprep.subr.mxu0 0.0
        %1005 = vmatpush1.msra.mxu0 0.0
        %1006 = vmatprep.subr.mxu0 0.0
        %1007 = vmatpush1.msra.mxu0 0.0
        %1008 = vmatprep.subr.mxu0 0.0
        %1009 = vmatpush1.msra.mxu0 0.0
        %1010 = vmatprep.subr.mxu0 0.0
        %1011 = vmatpush1.msra.mxu0 0.0
        %1012 = vmatprep.subr.mxu0 0.0
        %1013 = vmatpush1.msra.mxu0 0.0
        %1014 = vmatprep.subr.mxu0 0.0
        %1015 = vmatpush1.msra.mxu0 0.0
        %1016 = vmatprep.subr.mxu0 0.0
        %1017 = vmatpush1.msra.mxu0 0.0
        %1018 = vmatprep.subr.mxu0 0.0
        %1019 = vmatpush1.msra.mxu0 0.0
        %1020 = vmatprep.subr.mxu0 0.0
        %1021 = vmatpush1.msra.mxu0 0.0
        %1022 = vmatprep.subr.mxu0 0.0
        %1023 = vmatpush1.msra.mxu0 0.0
        %1024 = vmatprep.subr.mxu0 0.0
        %1025 = vmatpush1.msra.mxu0 0.0
        %1026 = vmatprep.subr.mxu0 0.0
        %1027 = vmatpush1.msra.mxu0 0.0
        %1028 = vmatprep.subr.mxu0 0.0
        %1029 = vmatpush1.msra.mxu0 0.0
        %1030 = vmatprep.subr.mxu0 0.0
        %1031 = vmatpush1.msra.mxu0 0.0
        %1032 = vmatprep.subr.mxu0 0.0
        %1033 = vmatpush1.msra.mxu0 0.0
        %1034 = vmatprep.subr.mxu0 0.0
        %1035 = vmatpush1.msra.mxu0 0.0
        %1036 = vmatprep.mubr.f32.mxu0 0.0
        %1037 = vmatmul.mubr.f32.gmra.mrb[0].mxu0 %v397
        %v1038 = vpop.f32.mrb[0].mxu0
        %v1039 = vadd.f32 %v393, %v1038
        %v1040 = vpop.f32.mrb[0].mxu0
        %1041 = vmatprep.mubr.f32.mxu0 0.0
        %1042 = vmatmul.mubr.f32.gmra.mrb[0].mxu0 %v400
        %v1043 = vpop.f32.mrb[0].mxu0
        %v1044 = vadd.f32 %v393, %v1043
        %v1045 = vpop.f32.mrb[0].mxu0
        %1046 = vmatprep.mubr.f32.mxu0 0.0
        %1047 = vmatmul.mubr.f32.gmra.mrb[0].mxu0 %v403
        %v1048 = vpop.f32.mrb[0].mxu0
        %v1049 = vadd.f32 %v393, %v1048
        %v1050 = vpop.f32.mrb[0].mxu0
        %1051 = vmatprep.mubr.f32.mxu0 0.0
        %1052 = vmatmul.mubr.f32.gmra.mrb[0].mxu0 %v406
        %v1053 = vpop.f32.mrb[0].mxu0
        %v1054 = vadd.f32 %v393, %v1053
        %v1055 = vpop.f32.mrb[0].mxu0
        %1056 = vmatprep.mubr.f32.mxu0 0.0
        %1057 = vmatmul.mubr.f32.gmra.mrb[0].mxu0 %v409
        %v1058 = vpop.f32.mrb[0].mxu0
        %v1059 = vadd.f32 %v393, %v1058
        %v1060 = vpop.f32.mrb[0].mxu0
        %1061 = vmatprep.mubr.f32.mxu0 0.0
        %1062 = vmatmul.mubr.f32.gmra.mrb[0].mxu0 %v412
        %v1063 = vpop.f32.mrb[0].mxu0
        %v1064 = vadd.f32 %v393, %v1063
        %v1065 = vpop.f32.mrb[0].mxu0
        %1066 = vmatprep.mubr.f32.mxu0 0.0
        %1067 = vmatmul.mubr.f32.gmra.mrb[0].mxu0 %v415
        %v1068 = vpop.f32.mrb[0].mxu0
        %v1069 = vadd.f32 %v393, %v1068
        %v1070 = vpop.f32.mrb[0].mxu0
        %1071 = vmatprep.mubr.f32.mxu0 0.0
        %1072 = vmatmul.mubr.f32.gmra.mrb[0].mxu0 %v418
        %v1073 = vpop.f32.mrb[0].mxu0
        %v1074 = vadd.f32 %v393, %v1073
        %v1075 = vpop.f32.mrb[0].mxu0
        %1076 = vmatprep.mubr.f32.mxu0 0.0
        %1077 = vmatmul.mubr.f32.gmra.mrb[0].mxu0 %v421
        %v1078 = vpop.f32.mrb[0].mxu0
        %v1079 = vadd.f32 %v393, %v1078
        %v1080 = vpop.f32.mrb[0].mxu0
        %1081 = vmatprep.mubr.f32.mxu0 0.0
        %1082 = vmatmul.mubr.f32.gmra.mrb[0].mxu0 %v424
        %v1083 = vpop.f32.mrb[0].mxu0
        %v1084 = vadd.f32 %v393, %v1083
        %v1085 = vpop.f32.mrb[0].mxu0
        %1086 = vmatprep.mubr.f32.mxu0 0.0
        %1087 = vmatmul.mubr.f32.gmra.mrb[0].mxu0 %v427
        %v1088 = vpop.f32.mrb[0].mxu0
        %v1089 = vadd.f32 %v393, %v1088
        %v1090 = vpop.f32.mrb[0].mxu0
        %1091 = vmatprep.mubr.f32.mxu0 0.0
        %1092 = vmatmul.mubr.f32.gmra.mrb[0].mxu0 %v430
        %v1093 = vpop.f32.mrb[0].mxu0
        %v1094 = vadd.f32 %v393, %v1093
        %v1095 = vpop.f32.mrb[0].mxu0
        %1096 = vmatprep.mubr.f32.mxu0 0.0
        %1097 = vmatmul.mubr.f32.gmra.mrb[0].mxu0 %v433
        %v1098 = vpop.f32.mrb[0].mxu0
        %v1099 = vadd.f32 %v393, %v1098
        %v1100 = vpop.f32.mrb[0].mxu0
        %1101 = vmatprep.mubr.f32.mxu0 0.0
        %1102 = vmatmul.mubr.f32.gmra.mrb[0].mxu0 %v436
        %v1103 = vpop.f32.mrb[0].mxu0
        %v1104 = vadd.f32 %v393, %v1103
        %v1105 = vpop.f32.mrb[0].mxu0
        %1106 = vmatprep.mubr.f32.mxu0 0.0
        %1107 = vmatmul.mubr.f32.gmra.mrb[0].mxu0 %v439
        %v1108 = vpop.f32.mrb[0].mxu0
        %v1109 = vadd.f32 %v393, %v1108
        %v1110 = vpop.f32.mrb[0].mxu0
        %1111 = vmatprep.mubr.f32.mxu0 0.0
        %1112 = vmatmul.mubr.f32.gmra.mrb[0].mxu0 %v442
        %v1113 = vpop.f32.mrb[0].mxu0
        %v1114 = vadd.f32 %v393, %v1113
        %v1115 = vpop.f32.mrb[0].mxu0
        %1116 = vmatprep.mubr.f32.mxu0 0.0
        %1117 = vmatmul.mubr.f32.gmra.mrb[0].mxu0 %v445
        %v1118 = vpop.f32.mrb[0].mxu0
        %v1119 = vadd.f32 %v393, %v1118
        %v1120 = vpop.f32.mrb[0].mxu0
        %1121 = vmatprep.mubr.f32.mxu0 0.0
        %1122 = vmatmul.mubr.f32.gmra.mrb[0].mxu0 %v448
        %v1123 = vpop.f32.mrb[0].mxu0
        %v1124 = vadd.f32 %v393, %v1123
        %v1125 = vpop.f32.mrb[0].mxu0
        %1126 = vmatprep.mubr.f32.mxu0 0.0
        %1127 = vmatmul.mubr.f32.gmra.mrb[0].mxu0 %v451
        %v1128 = vpop.f32.mrb[0].mxu0
        %v1129 = vadd.f32 %v393, %v1128
        %v1130 = vpop.f32.mrb[0].mxu0
        %1131 = vmatprep.mubr.f32.mxu0 0.0
        %1132 = vmatmul.mubr.f32.gmra.mrb[0].mxu0 %v454
        %v1133 = vpop.f32.mrb[0].mxu0
        %v1134 = vadd.f32 %v393, %v1133
        %v1135 = vpop.f32.mrb[0].mxu0
        %1136 = vmatprep.mubr.f32.mxu0 0.0
        %1137 = vmatmul.mubr.f32.gmra.mrb[0].mxu0 %v457
        %v1138 = vpop.f32.mrb[0].mxu0
        %v1139 = vadd.f32 %v393, %v1138
        %v1140 = vpop.f32.mrb[0].mxu0
        %1141 = vmatprep.mubr.f32.mxu0 0.0
        %1142 = vmatmul.mubr.f32.gmra.mrb[0].mxu0 %v460
        %v1143 = vpop.f32.mrb[0].mxu0
        %v1144 = vadd.f32 %v393, %v1143
        %v1145 = vpop.f32.mrb[0].mxu0
        %1146 = vmatprep.mubr.f32.mxu0 0.0
        %1147 = vmatmul.mubr.f32.gmra.mrb[0].mxu0 %v463
        %v1148 = vpop.f32.mrb[0].mxu0
        %v1149 = vadd.f32 %v393, %v1148
        %v1150 = vpop.f32.mrb[0].mxu0
        %1151 = vmatprep.mubr.f32.mxu0 0.0
        %1152 = vmatmul.mubr.f32.gmra.mrb[0].mxu0 %v466
        %v1153 = vpop.f32.mrb[0].mxu0
        %v1154 = vadd.f32 %v393, %v1153
        %v1155 = vpop.f32.mrb[0].mxu0
        %1156 = vmatprep.mubr.f32.mxu0 0.0
        %1157 = vmatmul.mubr.f32.gmra.mrb[0].mxu0 %v469
        %v1158 = vpop.f32.mrb[0].mxu0
        %v1159 = vadd.f32 %v393, %v1158
        %v1160 = vpop.f32.mrb[0].mxu0
        %1161 = vmatprep.mubr.f32.mxu0 0.0
        %1162 = vmatmul.mubr.f32.gmra.mrb[0].mxu0 %v472
        %v1163 = vpop.f32.mrb[0].mxu0
        %v1164 = vadd.f32 %v393, %v1163
        %v1165 = vpop.f32.mrb[0].mxu0
        %1166 = vmatprep.mubr.f32.mxu0 0.0
        %1167 = vmatmul.mubr.f32.gmra.mrb[0].mxu0 %v475
        %v1168 = vpop.f32.mrb[0].mxu0
        %v1169 = vadd.f32 %v393, %v1168
        %v1170 = vpop.f32.mrb[0].mxu0
        %1171 = vmatprep.mubr.f32.mxu0 0.0
        %1172 = vmatmul.mubr.f32.gmra.mrb[0].mxu0 %v478
        %v1173 = vpop.f32.mrb[0].mxu0
        %v1174 = vadd.f32 %v393, %v1173
        %v1175 = vpop.f32.mrb[0].mxu0
        %1176 = vmatprep.mubr.f32.mxu0 0.0
        %1177 = vmatmul.mubr.f32.gmra.mrb[0].mxu0 %v481
        %v1178 = vpop.f32.mrb[0].mxu0
        %v1179 = vadd.f32 %v393, %v1178
        %v1180 = vpop.f32.mrb[0].mxu0
        %1181 = vmatprep.mubr.f32.mxu0 0.0
        %1182 = vmatmul.mubr.f32.gmra.mrb[0].mxu0 %v484
        %v1183 = vpop.f32.mrb[0].mxu0
        %v1184 = vadd.f32 %v393, %v1183
        %v1185 = vpop.f32.mrb[0].mxu0
        %1186 = vmatprep.mubr.f32.mxu0 0.0
        %1187 = vmatmul.mubr.f32.gmra.mrb[0].mxu0 %v487
        %v1188 = vpop.f32.mrb[0].mxu0
        %v1189 = vadd.f32 %v393, %v1188
        %v1190 = vpop.f32.mrb[0].mxu0
        %1191 = vmatprep.mubr.f32.mxu0 0.0
        %1192 = vmatmul.mubr.f32.gmra.mrb[0].mxu0 %v490
        %v1193 = vpop.f32.mrb[0].mxu0
        %v1194 = vadd.f32 %v393, %v1193
        %v1195 = vpop.f32.mrb[0].mxu0
        %1196 = vmatprep.mubr.f32.mxu0 0.0
        %1197 = vmatmul.mubr.f32.gmra.mrb[0].mxu0 %v493
        %v1198 = vpop.f32.mrb[0].mxu0
        %v1199 = vadd.f32 %v393, %v1198
        %v1200 = vpop.f32.mrb[0].mxu0
        %1201 = vmatprep.mubr.f32.mxu0 0.0
        %1202 = vmatmul.mubr.f32.gmra.mrb[0].mxu0 %v496
        %v1203 = vpop.f32.mrb[0].mxu0
        %v1204 = vadd.f32 %v393, %v1203
        %v1205 = vpop.f32.mrb[0].mxu0
        %1206 = vmatprep.mubr.f32.mxu0 0.0
        %1207 = vmatmul.mubr.f32.gmra.mrb[0].mxu0 %v499
        %v1208 = vpop.f32.mrb[0].mxu0
        %v1209 = vadd.f32 %v393, %v1208
        %v1210 = vpop.f32.mrb[0].mxu0
        %1211 = vmatprep.mubr.f32.mxu0 0.0
        %1212 = vmatmul.mubr.f32.gmra.mrb[0].mxu0 %v502
        %v1213 = vpop.f32.mrb[0].mxu0
        %v1214 = vadd.f32 %v393, %v1213
        %v1215 = vpop.f32.mrb[0].mxu0
        %1216 = vmatprep.mubr.f32.mxu0 0.0
        %1217 = vmatmul.mubr.f32.gmra.mrb[0].mxu0 %v505
        %v1218 = vpop.f32.mrb[0].mxu0
        %v1219 = vadd.f32 %v393, %v1218
        %v1220 = vpop.f32.mrb[0].mxu0
        %1221 = vmatprep.mubr.f32.mxu0 0.0
        %1222 = vmatmul.mubr.f32.gmra.mrb[0].mxu0 %v508
        %v1223 = vpop.f32.mrb[0].mxu0
        %v1224 = vadd.f32 %v393, %v1223
        %v1225 = vpop.f32.mrb[0].mxu0
        %1226 = vmatprep.mubr.f32.mxu0 0.0
        %1227 = vmatmul.mubr.f32.gmra.mrb[0].mxu0 %v511
        %v1228 = vpop.f32.mrb[0].mxu0
        %v1229 = vadd.f32 %v393, %v1228
        %v1230 = vpop.f32.mrb[0].mxu0
        %1231 = vmatprep.mubr.f32.mxu0 0.0
        %1232 = vmatmul.mubr.f32.gmra.mrb[0].mxu0 %v514
        %v1233 = vpop.f32.mrb[0].mxu0
        %v1234 = vadd.f32 %v393, %v1233
        %v1235 = vpop.f32.mrb[0].mxu0
        %1236 = vmatprep.mubr.f32.mxu0 0.0
        %1237 = vmatmul.mubr.f32.gmra.mrb[0].mxu0 %v517
        %v1238 = vpop.f32.mrb[0].mxu0
        %v1239 = vadd.f32 %v393, %v1238
        %v1240 = vpop.f32.mrb[0].mxu0
        %1241 = vmatprep.mubr.f32.mxu0 0.0
        %1242 = vmatmul.mubr.f32.gmra.mrb[0].mxu0 %v520
        %v1243 = vpop.f32.mrb[0].mxu0
        %v1244 = vadd.f32 %v393, %v1243
        %v1245 = vpop.f32.mrb[0].mxu0
        %1246 = vmatprep.mubr.f32.mxu0 0.0
        %1247 = vmatmul.mubr.f32.gmra.mrb[0].mxu0 %v523
        %v1248 = vpop.f32.mrb[0].mxu0
        %v1249 = vadd.f32 %v393, %v1248
        %v1250 = vpop.f32.mrb[0].mxu0
        %1251 = vmatprep.mubr.f32.mxu0 0.0
        %1252 = vmatmul.mubr.f32.gmra.mrb[0].mxu0 %v526
        %v1253 = vpop.f32.mrb[0].mxu0
        %v1254 = vadd.f32 %v393, %v1253
        %v1255 = vpop.f32.mrb[0].mxu0
        %1256 = vmatprep.mubr.f32.mxu0 0.0
        %1257 = vmatmul.mubr.f32.gmra.mrb[0].mxu0 %v529
        %v1258 = vpop.f32.mrb[0].mxu0
        %v1259 = vadd.f32 %v393, %v1258
        %v1260 = vpop.f32.mrb[0].mxu0
        %1261 = vmatprep.mubr.f32.mxu0 0.0
        %1262 = vmatmul.mubr.f32.gmra.mrb[0].mxu0 %v532
        %v1263 = vpop.f32.mrb[0].mxu0
        %v1264 = vadd.f32 %v393, %v1263
        %v1265 = vpop.f32.mrb[0].mxu0
        %1266 = vmatprep.mubr.f32.mxu0 0.0
        %1267 = vmatmul.mubr.f32.gmra.mrb[0].mxu0 %v535
        %v1268 = vpop.f32.mrb[0].mxu0
        %v1269 = vadd.f32 %v393, %v1268
        %v1270 = vpop.f32.mrb[0].mxu0
        %1271 = vmatprep.mubr.f32.mxu0 0.0
        %1272 = vmatmul.mubr.f32.gmra.mrb[0].mxu0 %v538
        %v1273 = vpop.f32.mrb[0].mxu0
        %v1274 = vadd.f32 %v393, %v1273
        %v1275 = vpop.f32.mrb[0].mxu0
        %1276 = vmatprep.mubr.f32.mxu0 0.0
        %1277 = vmatmul.mubr.f32.gmra.mrb[0].mxu0 %v541
        %v1278 = vpop.f32.mrb[0].mxu0
        %v1279 = vadd.f32 %v393, %v1278
        %v1280 = vpop.f32.mrb[0].mxu0
        %1281 = vmatprep.mubr.f32.mxu0 0.0
        %1282 = vmatmul.mubr.f32.gmra.mrb[0].mxu0 %v544
        %v1283 = vpop.f32.mrb[0].mxu0
        %v1284 = vadd.f32 %v393, %v1283
        %v1285 = vpop.f32.mrb[0].mxu0
        %1286 = vmatprep.mubr.f32.mxu0 0.0
        %1287 = vmatmul.mubr.f32.gmra.mrb[0].mxu0 %v547
        %v1288 = vpop.f32.mrb[0].mxu0
        %v1289 = vadd.f32 %v393, %v1288
        %v1290 = vpop.f32.mrb[0].mxu0
        %1291 = vmatprep.mubr.f32.mxu0 0.0
        %1292 = vmatmul.mubr.f32.gmra.mrb[0].mxu0 %v550
        %v1293 = vpop.f32.mrb[0].mxu0
        %v1294 = vadd.f32 %v393, %v1293
        %v1295 = vpop.f32.mrb[0].mxu0
        %1296 = vmatprep.mubr.f32.mxu0 0.0
        %1297 = vmatmul.mubr.f32.gmra.mrb[0].mxu0 %v553
        %v1298 = vpop.f32.mrb[0].mxu0
        %v1299 = vadd.f32 %v393, %v1298
        %v1300 = vpop.f32.mrb[0].mxu0
        %1301 = vmatprep.mubr.f32.mxu0 0.0
        %1302 = vmatmul.mubr.f32.gmra.mrb[0].mxu0 %v556
        %v1303 = vpop.f32.mrb[0].mxu0
        %v1304 = vadd.f32 %v393, %v1303
        %v1305 = vpop.f32.mrb[0].mxu0
        %1306 = vmatprep.mubr.f32.mxu0 0.0
        %1307 = vmatmul.mubr.f32.gmra.mrb[0].mxu0 %v559
        %v1308 = vpop.f32.mrb[0].mxu0
        %v1309 = vadd.f32 %v393, %v1308
        %v1310 = vpop.f32.mrb[0].mxu0
        %1311 = vmatprep.mubr.f32.mxu0 0.0
        %1312 = vmatmul.mubr.f32.gmra.mrb[0].mxu0 %v562
        %v1313 = vpop.f32.mrb[0].mxu0
        %v1314 = vadd.f32 %v393, %v1313
        %v1315 = vpop.f32.mrb[0].mxu0
        %1316 = vmatprep.mubr.f32.mxu0 0.0
        %1317 = vmatmul.mubr.f32.gmra.mrb[0].mxu0 %v565
        %v1318 = vpop.f32.mrb[0].mxu0
        %v1319 = vadd.f32 %v393, %v1318
        %v1320 = vpop.f32.mrb[0].mxu0
        %1321 = vmatprep.mubr.f32.mxu0 0.0
        %1322 = vmatmul.mubr.f32.gmra.mrb[0].mxu0 %v568
        %v1323 = vpop.f32.mrb[0].mxu0
        %v1324 = vadd.f32 %v393, %v1323
        %v1325 = vpop.f32.mrb[0].mxu0
        %1326 = vmatprep.mubr.f32.mxu0 0.0
        %1327 = vmatmul.mubr.f32.gmra.mrb[0].mxu0 %v571
        %v1328 = vpop.f32.mrb[0].mxu0
        %v1329 = vadd.f32 %v393, %v1328
        %v1330 = vpop.f32.mrb[0].mxu0
        %1331 = vmatprep.mubr.f32.mxu0 0.0
        %1332 = vmatmul.mubr.f32.gmra.mrb[0].mxu0 %v574
        %v1333 = vpop.f32.mrb[0].mxu0
        %v1334 = vadd.f32 %v393, %v1333
        %v1335 = vpop.f32.mrb[0].mxu0
        %1336 = vmatprep.mubr.f32.mxu0 0.0
        %1337 = vmatmul.mubr.f32.gmra.mrb[0].mxu0 %v577
        %v1338 = vpop.f32.mrb[0].mxu0
        %v1339 = vadd.f32 %v393, %v1338
        %v1340 = vpop.f32.mrb[0].mxu0
        %1341 = vmatprep.mubr.f32.mxu0 0.0
        %1342 = vmatmul.mubr.f32.gmra.mrb[0].mxu0 %v580
        %v1343 = vpop.f32.mrb[0].mxu0
        %v1344 = vadd.f32 %v393, %v1343
        %v1345 = vpop.f32.mrb[0].mxu0
        %1346 = vmatprep.mubr.f32.mxu0 0.0
        %1347 = vmatmul.mubr.f32.gmra.mrb[0].mxu0 %v583
        %v1348 = vpop.f32.mrb[0].mxu0
        %v1349 = vadd.f32 %v393, %v1348
        %v1350 = vpop.f32.mrb[0].mxu0
        %1351 = vmatprep.mubr.f32.mxu0 0.0
        %1352 = vmatmul.mubr.f32.gmra.mrb[0].mxu0 %v586
        %v1353 = vpop.f32.mrb[0].mxu0
        %v1354 = vadd.f32 %v393, %v1353
        %v1355 = vpop.f32.mrb[0].mxu0
        %1356 = vmatprep.mubr.f32.mxu0 0.0
        %1357 = vmatmul.mubr.f32.gmra.mrb[0].mxu0 %v589
        %v1358 = vpop.f32.mrb[0].mxu0
        %v1359 = vadd.f32 %v393, %v1358
        %v1360 = vpop.f32.mrb[0].mxu0
        %1361 = vmatprep.mubr.f32.mxu0 0.0
        %1362 = vmatmul.mubr.f32.gmra.mrb[0].mxu0 %v592
        %v1363 = vpop.f32.mrb[0].mxu0
        %v1364 = vadd.f32 %v393, %v1363
        %v1365 = vpop.f32.mrb[0].mxu0
        %1366 = vmatprep.mubr.f32.mxu0 0.0
        %1367 = vmatmul.mubr.f32.gmra.mrb[0].mxu0 %v595
        %v1368 = vpop.f32.mrb[0].mxu0
        %v1369 = vadd.f32 %v393, %v1368
        %v1370 = vpop.f32.mrb[0].mxu0
        %1371 = vmatprep.mubr.f32.mxu0 0.0
        %1372 = vmatmul.mubr.f32.gmra.mrb[0].mxu0 %v598
        %v1373 = vpop.f32.mrb[0].mxu0
        %v1374 = vadd.f32 %v393, %v1373
        %v1375 = vpop.f32.mrb[0].mxu0
        %1376 = vmatprep.mubr.f32.mxu0 0.0
        %1377 = vmatmul.mubr.f32.gmra.mrb[0].mxu0 %v601
        %v1378 = vpop.f32.mrb[0].mxu0
        %v1379 = vadd.f32 %v393, %v1378
        %v1380 = vpop.f32.mrb[0].mxu0
        %1381 = vmatprep.mubr.f32.mxu0 0.0
        %1382 = vmatmul.mubr.f32.gmra.mrb[0].mxu0 %v604
        %v1383 = vpop.f32.mrb[0].mxu0
        %v1384 = vadd.f32 %v393, %v1383
        %v1385 = vpop.f32.mrb[0].mxu0
        %1386 = vmatprep.mubr.f32.mxu0 0.0
        %1387 = vmatmul.mubr.f32.gmra.mrb[0].mxu0 %v607
        %v1388 = vpop.f32.mrb[0].mxu0
        %v1389 = vadd.f32 %v393, %v1388
        %v1390 = vpop.f32.mrb[0].mxu0
        %1391 = vmatprep.mubr.f32.mxu0 0.0
        %1392 = vmatmul.mubr.f32.gmra.mrb[0].mxu0 %v610
        %v1393 = vpop.f32.mrb[0].mxu0
        %v1394 = vadd.f32 %v393, %v1393
        %v1395 = vpop.f32.mrb[0].mxu0
        %1396 = vmatprep.mubr.f32.mxu0 0.0
        %1397 = vmatmul.mubr.f32.gmra.mrb[0].mxu0 %v613
        %v1398 = vpop.f32.mrb[0].mxu0
        %v1399 = vadd.f32 %v393, %v1398
        %v1400 = vpop.f32.mrb[0].mxu0
        %1401 = vmatprep.mubr.f32.mxu0 0.0
        %1402 = vmatmul.mubr.f32.gmra.mrb[0].mxu0 %v616
        %v1403 = vpop.f32.mrb[0].mxu0
        %v1404 = vadd.f32 %v393, %v1403
        %v1405 = vpop.f32.mrb[0].mxu0
        %1406 = vmatprep.mubr.f32.mxu0 0.0
        %1407 = vmatmul.mubr.f32.gmra.mrb[0].mxu0 %v619
        %v1408 = vpop.f32.mrb[0].mxu0
        %v1409 = vadd.f32 %v393, %v1408
        %v1410 = vpop.f32.mrb[0].mxu0
        %1411 = vmatprep.mubr.f32.mxu0 0.0
        %1412 = vmatmul.mubr.f32.gmra.mrb[0].mxu0 %v622
        %v1413 = vpop.f32.mrb[0].mxu0
        %v1414 = vadd.f32 %v393, %v1413
        %v1415 = vpop.f32.mrb[0].mxu0
        %1416 = vmatprep.mubr.f32.mxu0 0.0
        %1417 = vmatmul.mubr.f32.gmra.mrb[0].mxu0 %v625
        %v1418 = vpop.f32.mrb[0].mxu0
        %v1419 = vadd.f32 %v393, %v1418
        %v1420 = vpop.f32.mrb[0].mxu0
        %1421 = vmatprep.mubr.f32.mxu0 0.0
        %1422 = vmatmul.mubr.f32.gmra.mrb[0].mxu0 %v628
        %v1423 = vpop.f32.mrb[0].mxu0
        %v1424 = vadd.f32 %v393, %v1423
        %v1425 = vpop.f32.mrb[0].mxu0
        %1426 = vmatprep.mubr.f32.mxu0 0.0
        %1427 = vmatmul.mubr.f32.gmra.mrb[0].mxu0 %v631
        %v1428 = vpop.f32.mrb[0].mxu0
        %v1429 = vadd.f32 %v393, %v1428
        %v1430 = vpop.f32.mrb[0].mxu0
        %1431 = vmatprep.mubr.f32.mxu0 0.0
        %1432 = vmatmul.mubr.f32.gmra.mrb[0].mxu0 %v634
        %v1433 = vpop.f32.mrb[0].mxu0
        %v1434 = vadd.f32 %v393, %v1433
        %v1435 = vpop.f32.mrb[0].mxu0
        %1436 = vmatprep.mubr.f32.mxu0 0.0
        %1437 = vmatmul.mubr.f32.gmra.mrb[0].mxu0 %v637
        %v1438 = vpop.f32.mrb[0].mxu0
        %v1439 = vadd.f32 %v393, %v1438
        %v1440 = vpop.f32.mrb[0].mxu0
        %1441 = vmatprep.mubr.f32.mxu0 0.0
        %1442 = vmatmul.mubr.f32.gmra.mrb[0].mxu0 %v640
        %v1443 = vpop.f32.mrb[0].mxu0
        %v1444 = vadd.f32 %v393, %v1443
        %v1445 = vpop.f32.mrb[0].mxu0
        %1446 = vmatprep.mubr.f32.mxu0 0.0
        %1447 = vmatmul.mubr.f32.gmra.mrb[0].mxu0 %v643
        %v1448 = vpop.f32.mrb[0].mxu0
        %v1449 = vadd.f32 %v393, %v1448
        %v1450 = vpop.f32.mrb[0].mxu0
        %1451 = vmatprep.mubr.f32.mxu0 0.0
        %1452 = vmatmul.mubr.f32.gmra.mrb[0].mxu0 %v646
        %v1453 = vpop.f32.mrb[0].mxu0
        %v1454 = vadd.f32 %v393, %v1453
        %v1455 = vpop.f32.mrb[0].mxu0
        %1456 = vmatprep.mubr.f32.mxu0 0.0
        %1457 = vmatmul.mubr.f32.gmra.mrb[0].mxu0 %v649
        %v1458 = vpop.f32.mrb[0].mxu0
        %v1459 = vadd.f32 %v393, %v1458
        %v1460 = vpop.f32.mrb[0].mxu0
        %1461 = vmatprep.mubr.f32.mxu0 0.0
        %1462 = vmatmul.mubr.f32.gmra.mrb[0].mxu0 %v652
        %v1463 = vpop.f32.mrb[0].mxu0
        %v1464 = vadd.f32 %v393, %v1463
        %v1465 = vpop.f32.mrb[0].mxu0
        %1466 = vmatprep.mubr.f32.mxu0 0.0
        %1467 = vmatmul.mubr.f32.gmra.mrb[0].mxu0 %v655
        %v1468 = vpop.f32.mrb[0].mxu0
        %v1469 = vadd.f32 %v393, %v1468
        %v1470 = vpop.f32.mrb[0].mxu0
        %1471 = vmatprep.mubr.f32.mxu0 0.0
        %1472 = vmatmul.mubr.f32.gmra.mrb[0].mxu0 %v658
        %v1473 = vpop.f32.mrb[0].mxu0
        %v1474 = vadd.f32 %v393, %v1473
        %v1475 = vpop.f32.mrb[0].mxu0
        %1476 = vmatprep.mubr.f32.mxu0 0.0
        %1477 = vmatmul.mubr.f32.gmra.mrb[0].mxu0 %v661
        %v1478 = vpop.f32.mrb[0].mxu0
        %v1479 = vadd.f32 %v393, %v1478
        %v1480 = vpop.f32.mrb[0].mxu0
        %1481 = vmatprep.mubr.f32.mxu0 0.0
        %1482 = vmatmul.mubr.f32.gmra.mrb[0].mxu0 %v664
        %v1483 = vpop.f32.mrb[0].mxu0
        %v1484 = vadd.f32 %v393, %v1483
        %v1485 = vpop.f32.mrb[0].mxu0
        %1486 = vmatprep.mubr.f32.mxu0 0.0
        %1487 = vmatmul.mubr.f32.gmra.mrb[0].mxu0 %v667
        %v1488 = vpop.f32.mrb[0].mxu0
        %v1489 = vadd.f32 %v393, %v1488
        %v1490 = vpop.f32.mrb[0].mxu0
        %1491 = vmatprep.mubr.f32.mxu0 0.0
        %1492 = vmatmul.mubr.f32.gmra.mrb[0].mxu0 %v670
        %v1493 = vpop.f32.mrb[0].mxu0
        %v1494 = vadd.f32 %v393, %v1493
        %v1495 = vpop.f32.mrb[0].mxu0
        %1496 = vmatprep.mubr.f32.mxu0 0.0
        %1497 = vmatmul.mubr.f32.gmra.mrb[0].mxu0 %v673
        %v1498 = vpop.f32.mrb[0].mxu0
        %v1499 = vadd.f32 %v393, %v1498
        %v1500 = vpop.f32.mrb[0].mxu0
        %1501 = vmatprep.mubr.f32.mxu0 0.0
        %1502 = vmatmul.mubr.f32.gmra.mrb[0].mxu0 %v676
        %v1503 = vpop.f32.mrb[0].mxu0
        %v1504 = vadd.f32 %v393, %v1503
        %v1505 = vpop.f32.mrb[0].mxu0
        %1506 = vmatprep.mubr.f32.mxu0 0.0
        %1507 = vmatmul.mubr.f32.gmra.mrb[0].mxu0 %v679
        %v1508 = vpop.f32.mrb[0].mxu0
        %v1509 = vadd.f32 %v393, %v1508
        %v1510 = vpop.f32.mrb[0].mxu0
        %1511 = vmatprep.mubr.f32.mxu0 0.0
        %1512 = vmatmul.mubr.f32.gmra.mrb[0].mxu0 %v682
        %v1513 = vpop.f32.mrb[0].mxu0
        %v1514 = vadd.f32 %v393, %v1513
        %v1515 = vpop.f32.mrb[0].mxu0
        %1516 = vmatprep.mubr.f32.mxu0 0.0
        %1517 = vmatmul.mubr.f32.gmra.mrb[0].mxu0 %v685
        %v1518 = vpop.f32.mrb[0].mxu0
        %v1519 = vadd.f32 %v393, %v1518
        %v1520 = vpop.f32.mrb[0].mxu0
        %1521 = vmatprep.mubr.f32.mxu0 0.0
        %1522 = vmatmul.mubr.f32.gmra.mrb[0].mxu0 %v688
        %v1523 = vpop.f32.mrb[0].mxu0
        %v1524 = vadd.f32 %v393, %v1523
        %v1525 = vpop.f32.mrb[0].mxu0
        %1526 = vmatprep.mubr.f32.mxu0 0.0
        %1527 = vmatmul.mubr.f32.gmra.mrb[0].mxu0 %v691
        %v1528 = vpop.f32.mrb[0].mxu0
        %v1529 = vadd.f32 %v393, %v1528
        %v1530 = vpop.f32.mrb[0].mxu0
        %1531 = vmatprep.mubr.f32.mxu0 0.0
        %1532 = vmatmul.mubr.f32.gmra.mrb[0].mxu0 %v694
        %v1533 = vpop.f32.mrb[0].mxu0
        %v1534 = vadd.f32 %v393, %v1533
        %v1535 = vpop.f32.mrb[0].mxu0
        %1536 = vmatprep.mubr.f32.mxu0 0.0
        %1537 = vmatmul.mubr.f32.gmra.mrb[0].mxu0 %v697
        %v1538 = vpop.f32.mrb[0].mxu0
        %v1539 = vadd.f32 %v393, %v1538
        %v1540 = vpop.f32.mrb[0].mxu0
        %1541 = vmatprep.mubr.f32.mxu0 0.0
        %1542 = vmatmul.mubr.f32.gmra.mrb[0].mxu0 %v700
        %v1543 = vpop.f32.mrb[0].mxu0
        %v1544 = vadd.f32 %v393, %v1543
        %v1545 = vpop.f32.mrb[0].mxu0
        %1546 = vmatprep.mubr.f32.mxu0 0.0
        %1547 = vmatmul.mubr.f32.gmra.mrb[0].mxu0 %v703
        %v1548 = vpop.f32.mrb[0].mxu0
        %v1549 = vadd.f32 %v393, %v1548
        %v1550 = vpop.f32.mrb[0].mxu0
        %1551 = vmatprep.mubr.f32.mxu0 0.0
        %1552 = vmatmul.mubr.f32.gmra.mrb[0].mxu0 %v706
        %v1553 = vpop.f32.mrb[0].mxu0
        %v1554 = vadd.f32 %v393, %v1553
        %v1555 = vpop.f32.mrb[0].mxu0
        %1556 = vmatprep.mubr.f32.mxu0 0.0
        %1557 = vmatmul.mubr.f32.gmra.mrb[0].mxu0 %v709
        %v1558 = vpop.f32.mrb[0].mxu0
        %v1559 = vadd.f32 %v393, %v1558
        %v1560 = vpop.f32.mrb[0].mxu0
        %1561 = vmatprep.mubr.f32.mxu0 0.0
        %1562 = vmatmul.mubr.f32.gmra.mrb[0].mxu0 %v712
        %v1563 = vpop.f32.mrb[0].mxu0
        %v1564 = vadd.f32 %v393, %v1563
        %v1565 = vpop.f32.mrb[0].mxu0
        %1566 = vmatprep.mubr.f32.mxu0 0.0
        %1567 = vmatmul.mubr.f32.gmra.mrb[0].mxu0 %v715
        %v1568 = vpop.f32.mrb[0].mxu0
        %v1569 = vadd.f32 %v393, %v1568
        %v1570 = vpop.f32.mrb[0].mxu0
        %1571 = vmatprep.mubr.f32.mxu0 0.0
        %1572 = vmatmul.mubr.f32.gmra.mrb[0].mxu0 %v718
        %v1573 = vpop.f32.mrb[0].mxu0
        %v1574 = vadd.f32 %v393, %v1573
        %v1575 = vpop.f32.mrb[0].mxu0
        %1576 = vmatprep.mubr.f32.mxu0 0.0
        %1577 = vmatmul.mubr.f32.gmra.mrb[0].mxu0 %v721
        %v1578 = vpop.f32.mrb[0].mxu0
        %v1579 = vadd.f32 %v393, %v1578
        %v1580 = vpop.f32.mrb[0].mxu0
        %1581 = vmatprep.mubr.f32.mxu0 0.0
        %1582 = vmatmul.mubr.f32.gmra.mrb[0].mxu0 %v724
        %v1583 = vpop.f32.mrb[0].mxu0
        %v1584 = vadd.f32 %v393, %v1583
        %v1585 = vpop.f32.mrb[0].mxu0
        %1586 = vmatprep.mubr.f32.mxu0 0.0
        %1587 = vmatmul.mubr.f32.gmra.mrb[0].mxu0 %v727
        %v1588 = vpop.f32.mrb[0].mxu0
        %v1589 = vadd.f32 %v393, %v1588
        %v1590 = vpop.f32.mrb[0].mxu0
        %1591 = vmatprep.mubr.f32.mxu0 0.0
        %1592 = vmatmul.mubr.f32.gmra.mrb[0].mxu0 %v730
        %v1593 = vpop.f32.mrb[0].mxu0
        %v1594 = vadd.f32 %v393, %v1593
        %v1595 = vpop.f32.mrb[0].mxu0
        %1596 = vmatprep.mubr.f32.mxu0 0.0
        %1597 = vmatmul.mubr.f32.gmra.mrb[0].mxu0 %v733
        %v1598 = vpop.f32.mrb[0].mxu0
        %v1599 = vadd.f32 %v393, %v1598
        %v1600 = vpop.f32.mrb[0].mxu0
        %1601 = vmatprep.mubr.f32.mxu0 0.0
        %1602 = vmatmul.mubr.f32.gmra.mrb[0].mxu0 %v736
        %v1603 = vpop.f32.mrb[0].mxu0
        %v1604 = vadd.f32 %v393, %v1603
        %v1605 = vpop.f32.mrb[0].mxu0
        %1606 = vmatprep.mubr.f32.mxu0 0.0
        %1607 = vmatmul.mubr.f32.gmra.mrb[0].mxu0 %v739
        %v1608 = vpop.f32.mrb[0].mxu0
        %v1609 = vadd.f32 %v393, %v1608
        %v1610 = vpop.f32.mrb[0].mxu0
        %1611 = vmatprep.mubr.f32.mxu0 0.0
        %1612 = vmatmul.mubr.f32.gmra.mrb[0].mxu0 %v742
        %v1613 = vpop.f32.mrb[0].mxu0
        %v1614 = vadd.f32 %v393, %v1613
        %v1615 = vpop.f32.mrb[0].mxu0
        %1616 = vmatprep.mubr.f32.mxu0 0.0
        %1617 = vmatmul.mubr.f32.gmra.mrb[0].mxu0 %v745
        %v1618 = vpop.f32.mrb[0].mxu0
        %v1619 = vadd.f32 %v393, %v1618
        %v1620 = vpop.f32.mrb[0].mxu0
        %1621 = vmatprep.mubr.f32.mxu0 0.0
        %1622 = vmatmul.mubr.f32.gmra.mrb[0].mxu0 %v748
        %v1623 = vpop.f32.mrb[0].mxu0
        %v1624 = vadd.f32 %v393, %v1623
        %v1625 = vpop.f32.mrb[0].mxu0
        %1626 = vmatprep.mubr.f32.mxu0 0.0
        %1627 = vmatmul.mubr.f32.gmra.mrb[0].mxu0 %v751
        %v1628 = vpop.f32.mrb[0].mxu0
        %v1629 = vadd.f32 %v393, %v1628
        %v1630 = vpop.f32.mrb[0].mxu0
        %1631 = vmatprep.mubr.f32.mxu0 0.0
        %1632 = vmatmul.mubr.f32.gmra.mrb[0].mxu0 %v754
        %v1633 = vpop.f32.mrb[0].mxu0
        %v1634 = vadd.f32 %v393, %v1633
        %v1635 = vpop.f32.mrb[0].mxu0
        %1636 = vmatprep.mubr.f32.mxu0 0.0
        %1637 = vmatmul.mubr.f32.gmra.mrb[0].mxu0 %v757
        %v1638 = vpop.f32.mrb[0].mxu0
        %v1639 = vadd.f32 %v393, %v1638
        %v1640 = vpop.f32.mrb[0].mxu0
        %1641 = vmatprep.mubr.f32.mxu0 0.0
        %1642 = vmatmul.mubr.f32.gmra.mrb[0].mxu0 %v760
        %v1643 = vpop.f32.mrb[0].mxu0
        %v1644 = vadd.f32 %v393, %v1643
        %v1645 = vpop.f32.mrb[0].mxu0
        %1646 = vmatprep.mubr.f32.mxu0 0.0
        %1647 = vmatmul.mubr.f32.gmra.mrb[0].mxu0 %v763
        %v1648 = vpop.f32.mrb[0].mxu0
        %v1649 = vadd.f32 %v393, %v1648
        %v1650 = vpop.f32.mrb[0].mxu0
        %1651 = vmatprep.mubr.f32.mxu0 0.0
        %1652 = vmatmul.mubr.f32.gmra.mrb[0].mxu0 %v766
        %v1653 = vpop.f32.mrb[0].mxu0
        %v1654 = vadd.f32 %v393, %v1653
        %v1655 = vpop.f32.mrb[0].mxu0
        %1656 = vmatprep.mubr.f32.mxu0 0.0
        %1657 = vmatmul.mubr.f32.gmra.mrb[0].mxu0 %v769
        %v1658 = vpop.f32.mrb[0].mxu0
        %v1659 = vadd.f32 %v393, %v1658
        %v1660 = vpop.f32.mrb[0].mxu0
        %1661 = vmatprep.mubr.f32.mxu0 0.0
        %1662 = vmatmul.mubr.f32.gmra.mrb[0].mxu0 %v772
        %v1663 = vpop.f32.mrb[0].mxu0
        %v1664 = vadd.f32 %v393, %v1663
        %v1665 = vpop.f32.mrb[0].mxu0
        %1666 = vmatprep.mubr.f32.mxu0 0.0
        %1667 = vmatmul.mubr.f32.gmra.mrb[0].mxu0 %v775
        %v1668 = vpop.f32.mrb[0].mxu0
        %v1669 = vadd.f32 %v393, %v1668
        %v1670 = vpop.f32.mrb[0].mxu0
        %1671 = vmatprep.mubr.f32.mxu0 0.0
        %1672 = vmatmul.mubr.f32.gmra.mrb[0].mxu0 %v778
        %v1673 = vpop.f32.mrb[0].mxu0
        %v1674 = vadd.f32 %v393, %v1673
        %v1675 = vpop.f32.mrb[0].mxu0
        %1676 = vmatprep.mubr.f32.mxu0 0.0
        %1677 = vmatmul.mubr.f32.gmra.mrb[0].mxu0 %v781
        %v1678 = vpop.f32.mrb[0].mxu0
        %v1679 = vadd.f32 %v393, %v1678
        %v1680 = vpop.f32.mrb[0].mxu0
        %1681 = vmatprep.mubr.f32.mxu0 0.0
        %1682 = vmatmul.mubr.f32.gmra.mrb[0].mxu0 %v784
        %v1683 = vpop.f32.mrb[0].mxu0
        %v1684 = vadd.f32 %v393, %v1683
        %v1685 = vpop.f32.mrb[0].mxu0
        %1686 = vmatprep.mubr.f32.mxu0 0.0
        %1687 = vmatmul.mubr.f32.gmra.mrb[0].mxu0 %v787
        %v1688 = vpop.f32.mrb[0].mxu0
        %v1689 = vadd.f32 %v393, %v1688
        %v1690 = vpop.f32.mrb[0].mxu0
        %1691 = vmatprep.mubr.f32.mxu0 0.0
        %1692 = vmatmul.mubr.f32.gmra.mrb[0].mxu0 %v790
        %v1693 = vpop.f32.mrb[0].mxu0
        %v1694 = vadd.f32 %v393, %v1693
        %v1695 = vpop.f32.mrb[0].mxu0
        %1696 = vmatprep.mubr.f32.mxu0 0.0
        %1697 = vmatmul.mubr.f32.gmra.mrb[0].mxu0 %v793
        %v1698 = vpop.f32.mrb[0].mxu0
        %v1699 = vadd.f32 %v393, %v1698
        %v1700 = vpop.f32.mrb[0].mxu0
        %1701 = vmatprep.mubr.f32.mxu0 0.0
        %1702 = vmatmul.mubr.f32.gmra.mrb[0].mxu0 %v796
        %v1703 = vpop.f32.mrb[0].mxu0
        %v1704 = vadd.f32 %v393, %v1703
        %v1705 = vpop.f32.mrb[0].mxu0
        %1706 = vmatprep.mubr.f32.mxu0 0.0
        %1707 = vmatmul.mubr.f32.gmra.mrb[0].mxu0 %v799
        %v1708 = vpop.f32.mrb[0].mxu0
        %v1709 = vadd.f32 %v393, %v1708
        %v1710 = vpop.f32.mrb[0].mxu0
        %1711 = vmatprep.mubr.f32.mxu0 0.0
        %1712 = vmatmul.mubr.f32.gmra.mrb[0].mxu0 %v802
        %v1713 = vpop.f32.mrb[0].mxu0
        %v1714 = vadd.f32 %v393, %v1713
        %v1715 = vpop.f32.mrb[0].mxu0
        %1716 = vmatprep.mubr.f32.mxu0 0.0
        %1717 = vmatmul.mubr.f32.gmra.mrb[0].mxu0 %v805
        %v1718 = vpop.f32.mrb[0].mxu0
        %v1719 = vadd.f32 %v393, %v1718
        %v1720 = vpop.f32.mrb[0].mxu0
        %1721 = vmatprep.mubr.f32.mxu0 0.0
        %1722 = vmatmul.mubr.f32.gmra.mrb[0].mxu0 %v808
        %v1723 = vpop.f32.mrb[0].mxu0
        %v1724 = vadd.f32 %v393, %v1723
        %v1725 = vpop.f32.mrb[0].mxu0
        %1726 = vmatprep.mubr.f32.mxu0 0.0
        %1727 = vmatmul.mubr.f32.gmra.mrb[0].mxu0 %v811
        %v1728 = vpop.f32.mrb[0].mxu0
        %v1729 = vadd.f32 %v393, %v1728
        %v1730 = vpop.f32.mrb[0].mxu0
        %1731 = vmatprep.mubr.f32.mxu0 0.0
        %1732 = vmatmul.mubr.f32.gmra.mrb[0].mxu0 %v814
        %v1733 = vpop.f32.mrb[0].mxu0
        %v1734 = vadd.f32 %v393, %v1733
        %v1735 = vpop.f32.mrb[0].mxu0
        %1736 = vmatprep.mubr.f32.mxu0 0.0
        %1737 = vmatmul.mubr.f32.gmra.mrb[0].mxu0 %v817
        %v1738 = vpop.f32.mrb[0].mxu0
        %v1739 = vadd.f32 %v393, %v1738
        %v1740 = vpop.f32.mrb[0].mxu0
        %1741 = vmatprep.mubr.f32.mxu0 0.0
        %1742 = vmatmul.mubr.f32.gmra.mrb[0].mxu0 %v820
        %v1743 = vpop.f32.mrb[0].mxu0
        %v1744 = vadd.f32 %v393, %v1743
        %v1745 = vpop.f32.mrb[0].mxu0
        %1746 = vmatprep.mubr.f32.mxu0 0.0
        %1747 = vmatmul.mubr.f32.gmra.mrb[0].mxu0 %v823
        %v1748 = vpop.f32.mrb[0].mxu0
        %v1749 = vadd.f32 %v393, %v1748
        %v1750 = vpop.f32.mrb[0].mxu0
        %1751 = vmatprep.mubr.f32.mxu0 0.0
        %1752 = vmatmul.mubr.f32.gmra.mrb[0].mxu0 %v826
        %v1753 = vpop.f32.mrb[0].mxu0
        %v1754 = vadd.f32 %v393, %v1753
        %v1755 = vpop.f32.mrb[0].mxu0
        %1756 = vmatprep.mubr.f32.mxu0 0.0
        %1757 = vmatmul.mubr.f32.gmra.mrb[0].mxu0 %v829
        %v1758 = vpop.f32.mrb[0].mxu0
        %v1759 = vadd.f32 %v393, %v1758
        %v1760 = vpop.f32.mrb[0].mxu0
        %1761 = vmatprep.mubr.f32.mxu0 0.0
        %1762 = vmatmul.mubr.f32.gmra.mrb[0].mxu0 %v832
        %v1763 = vpop.f32.mrb[0].mxu0
        %v1764 = vadd.f32 %v393, %v1763
        %v1765 = vpop.f32.mrb[0].mxu0
        %1766 = vmatprep.mubr.f32.mxu0 0.0
        %1767 = vmatmul.mubr.f32.gmra.mrb[0].mxu0 %v835
        %v1768 = vpop.f32.mrb[0].mxu0
        %v1769 = vadd.f32 %v393, %v1768
        %v1770 = vpop.f32.mrb[0].mxu0
        %1771 = vmatprep.mubr.f32.mxu0 0.0
        %1772 = vmatmul.mubr.f32.gmra.mrb[0].mxu0 %v838
        %v1773 = vpop.f32.mrb[0].mxu0
        %v1774 = vadd.f32 %v393, %v1773
        %v1775 = vpop.f32.mrb[0].mxu0
        %1776 = vmatprep.mubr.f32.mxu0 0.0
        %1777 = vmatmul.mubr.f32.gmra.mrb[0].mxu0 %v841
        %v1778 = vpop.f32.mrb[0].mxu0
        %v1779 = vadd.f32 %v393, %v1778
        %v1780 = vpop.f32.mrb[0].mxu0
        %1781 = vmatprep.mubr.f32.mxu0 0.0
        %1782 = vmatmul.mubr.f32.gmra.mrb[0].mxu0 %v844
        %v1783 = vpop.f32.mrb[0].mxu0
        %v1784 = vadd.f32 %v393, %v1783
        %v1785 = vpop.f32.mrb[0].mxu0
        %1786 = vmatprep.mubr.f32.mxu0 0.0
        %1787 = vmatmul.mubr.f32.gmra.mrb[0].mxu0 %v847
        %v1788 = vpop.f32.mrb[0].mxu0
        %v1789 = vadd.f32 %v393, %v1788
        %v1790 = vpop.f32.mrb[0].mxu0
        %1791 = vmatprep.mubr.f32.mxu0 0.0
        %1792 = vmatmul.mubr.f32.gmra.mrb[0].mxu0 %v850
        %v1793 = vpop.f32.mrb[0].mxu0
        %v1794 = vadd.f32 %v393, %v1793
        %v1795 = vpop.f32.mrb[0].mxu0
        %1796 = vmatprep.mubr.f32.mxu0 0.0
        %1797 = vmatmul.mubr.f32.gmra.mrb[0].mxu0 %v853
        %v1798 = vpop.f32.mrb[0].mxu0
        %v1799 = vadd.f32 %v393, %v1798
        %v1800 = vpop.f32.mrb[0].mxu0
        %1801 = vmatprep.mubr.f32.mxu0 0.0
        %1802 = vmatmul.mubr.f32.gmra.mrb[0].mxu0 %v856
        %v1803 = vpop.f32.mrb[0].mxu0
        %v1804 = vadd.f32 %v393, %v1803
        %v1805 = vpop.f32.mrb[0].mxu0
        %1806 = vmatprep.mubr.f32.mxu0 0.0
        %1807 = vmatmul.mubr.f32.gmra.mrb[0].mxu0 %v859
        %v1808 = vpop.f32.mrb[0].mxu0
        %v1809 = vadd.f32 %v393, %v1808
        %v1810 = vpop.f32.mrb[0].mxu0
        %1811 = vmatprep.mubr.f32.mxu0 0.0
        %1812 = vmatmul.mubr.f32.gmra.mrb[0].mxu0 %v862
        %v1813 = vpop.f32.mrb[0].mxu0
        %v1814 = vadd.f32 %v393, %v1813
        %v1815 = vpop.f32.mrb[0].mxu0
        %1816 = vmatprep.mubr.f32.mxu0 0.0
        %1817 = vmatmul.mubr.f32.gmra.mrb[0].mxu0 %v865
        %v1818 = vpop.f32.mrb[0].mxu0
        %v1819 = vadd.f32 %v393, %v1818
        %v1820 = vpop.f32.mrb[0].mxu0
        %1821 = vmatprep.mubr.f32.mxu0 0.0
        %1822 = vmatmul.mubr.f32.gmra.mrb[0].mxu0 %v868
        %v1823 = vpop.f32.mrb[0].mxu0
        %v1824 = vadd.f32 %v393, %v1823
        %v1825 = vpop.f32.mrb[0].mxu0
        %1826 = vmatprep.mubr.f32.mxu0 0.0
        %1827 = vmatmul.mubr.f32.gmra.mrb[0].mxu0 %v871
        %v1828 = vpop.f32.mrb[0].mxu0
        %v1829 = vadd.f32 %v393, %v1828
        %v1830 = vpop.f32.mrb[0].mxu0
        %1831 = vmatprep.mubr.f32.mxu0 0.0
        %1832 = vmatmul.mubr.f32.gmra.mrb[0].mxu0 %v874
        %v1833 = vpop.f32.mrb[0].mxu0
        %v1834 = vadd.f32 %v393, %v1833
        %v1835 = vpop.f32.mrb[0].mxu0
        %1836 = vmatprep.mubr.f32.mxu0 0.0
        %1837 = vmatmul.mubr.f32.gmra.mrb[0].mxu0 %v877
        %v1838 = vpop.f32.mrb[0].mxu0
        %v1839 = vadd.f32 %v393, %v1838
        %v1840 = vpop.f32.mrb[0].mxu0
        %1841 = vmatprep.mubr.f32.mxu0 0.0
        %1842 = vmatmul.mubr.f32.gmra.mrb[0].mxu0 %v880
        %v1843 = vpop.f32.mrb[0].mxu0
        %v1844 = vadd.f32 %v393, %v1843
        %v1845 = vpop.f32.mrb[0].mxu0
        %1846 = vmatprep.mubr.f32.mxu0 0.0
        %1847 = vmatmul.mubr.f32.gmra.mrb[0].mxu0 %v883
        %v1848 = vpop.f32.mrb[0].mxu0
        %v1849 = vadd.f32 %v393, %v1848
        %v1850 = vpop.f32.mrb[0].mxu0
        %1851 = vmatprep.mubr.f32.mxu0 0.0
        %1852 = vmatmul.mubr.f32.gmra.mrb[0].mxu0 %v886
        %v1853 = vpop.f32.mrb[0].mxu0
        %v1854 = vadd.f32 %v393, %v1853
        %v1855 = vpop.f32.mrb[0].mxu0
        %1856 = vmatprep.mubr.f32.mxu0 0.0
        %1857 = vmatmul.mubr.f32.gmra.mrb[0].mxu0 %v889
        %v1858 = vpop.f32.mrb[0].mxu0
        %v1859 = vadd.f32 %v393, %v1858
        %v1860 = vpop.f32.mrb[0].mxu0
        %1861 = vmatprep.mubr.f32.mxu0 0.0
        %1862 = vmatmul.mubr.f32.gmra.mrb[0].mxu0 %v892
        %v1863 = vpop.f32.mrb[0].mxu0
        %v1864 = vadd.f32 %v393, %v1863
        %v1865 = vpop.f32.mrb[0].mxu0
        %1866 = vmatprep.mubr.f32.mxu0 0.0
        %1867 = vmatmul.mubr.f32.gmra.mrb[0].mxu0 %v895
        %v1868 = vpop.f32.mrb[0].mxu0
        %v1869 = vadd.f32 %v393, %v1868
        %v1870 = vpop.f32.mrb[0].mxu0
        %1871 = vmatprep.mubr.f32.mxu0 0.0
        %1872 = vmatmul.mubr.f32.gmra.mrb[0].mxu0 %v898
        %v1873 = vpop.f32.mrb[0].mxu0
        %v1874 = vadd.f32 %v393, %v1873
        %v1875 = vpop.f32.mrb[0].mxu0
        %1876 = vmatprep.mubr.f32.mxu0 0.0
        %1877 = vmatmul.mubr.f32.gmra.mrb[0].mxu0 %v901
        %v1878 = vpop.f32.mrb[0].mxu0
        %v1879 = vadd.f32 %v393, %v1878
        %v1880 = vpop.f32.mrb[0].mxu0
        %1881 = vmatprep.mubr.f32.mxu0 0.0
        %1882 = vmatmul.mubr.f32.gmra.mrb[0].mxu0 %v904
        %v1883 = vpop.f32.mrb[0].mxu0
        %v1884 = vadd.f32 %v393, %v1883
        %v1885 = vpop.f32.mrb[0].mxu0
        %1886 = vmatprep.mubr.f32.mxu0 0.0
        %1887 = vmatmul.mubr.f32.gmra.mrb[0].mxu0 %v907
        %v1888 = vpop.f32.mrb[0].mxu0
        %v1889 = vadd.f32 %v393, %v1888
        %v1890 = vpop.f32.mrb[0].mxu0
        %1891 = vmatprep.mubr.f32.mxu0 0.0
        %1892 = vmatmul.mubr.f32.gmra.mrb[0].mxu0 %v910
        %v1893 = vpop.f32.mrb[0].mxu0
        %v1894 = vadd.f32 %v393, %v1893
        %v1895 = vpop.f32.mrb[0].mxu0
        %1896 = vmatprep.mubr.f32.mxu0 0.0
        %1897 = vmatmul.mubr.f32.gmra.mrb[0].mxu0 %v913
        %v1898 = vpop.f32.mrb[0].mxu0
        %v1899 = vadd.f32 %v393, %v1898
        %v1900 = vpop.f32.mrb[0].mxu0
        %1901 = vmatprep.mubr.f32.mxu0 0.0
        %1902 = vmatmul.mubr.f32.gmra.mrb[0].mxu0 %v916
        %v1903 = vpop.f32.mrb[0].mxu0
        %v1904 = vadd.f32 %v393, %v1903
        %v1905 = vpop.f32.mrb[0].mxu0
        %1906 = vmatprep.mubr.f32.mxu0 0.0
        %1907 = vmatmul.mubr.f32.gmra.mrb[0].mxu0 %v919
        %v1908 = vpop.f32.mrb[0].mxu0
        %v1909 = vadd.f32 %v393, %v1908
        %v1910 = vpop.f32.mrb[0].mxu0
        %1911 = vmatprep.mubr.f32.mxu0 0.0
        %1912 = vmatmul.mubr.f32.gmra.mrb[0].mxu0 %v922
        %v1913 = vpop.f32.mrb[0].mxu0
        %v1914 = vadd.f32 %v393, %v1913
        %v1915 = vpop.f32.mrb[0].mxu0
        %1916 = vmatprep.mubr.f32.mxu0 0.0
        %1917 = vmatmul.mubr.f32.gmra.mrb[0].mxu0 %v925
        %v1918 = vpop.f32.mrb[0].mxu0
        %v1919 = vadd.f32 %v393, %v1918
        %v1920 = vpop.f32.mrb[0].mxu0
        %1921 = vmatprep.mubr.f32.mxu0 0.0
        %1922 = vmatmul.mubr.f32.gmra.mrb[0].mxu0 %v928
        %v1923 = vpop.f32.mrb[0].mxu0
        %v1924 = vadd.f32 %v393, %v1923
        %v1925 = vpop.f32.mrb[0].mxu0
        %1926 = vmatprep.mubr.f32.mxu0 0.0
        %1927 = vmatmul.mubr.f32.gmra.mrb[0].mxu0 %v931
        %v1928 = vpop.f32.mrb[0].mxu0
        %v1929 = vadd.f32 %v393, %v1928
        %v1930 = vpop.f32.mrb[0].mxu0
        %1931 = vmatprep.mubr.f32.mxu0 0.0
        %1932 = vmatmul.mubr.f32.gmra.mrb[0].mxu0 %v934
        %v1933 = vpop.f32.mrb[0].mxu0
        %v1934 = vadd.f32 %v393, %v1933
        %v1935 = vpop.f32.mrb[0].mxu0
        %1936 = vmatprep.mubr.f32.mxu0 0.0
        %1937 = vmatmul.mubr.f32.gmra.mrb[0].mxu0 %v937
        %v1938 = vpop.f32.mrb[0].mxu0
        %v1939 = vadd.f32 %v393, %v1938
        %v1940 = vpop.f32.mrb[0].mxu0
        %1941 = vmatprep.mubr.f32.mxu0 0.0
        %1942 = vmatmul.mubr.f32.gmra.mrb[0].mxu0 %v940
        %v1943 = vpop.f32.mrb[0].mxu0
        %v1944 = vadd.f32 %v393, %v1943
        %v1945 = vpop.f32.mrb[0].mxu0
        %1946 = vmatprep.mubr.f32.mxu0 0.0
        %1947 = vmatmul.mubr.f32.gmra.mrb[0].mxu0 %v943
        %v1948 = vpop.f32.mrb[0].mxu0
        %v1949 = vadd.f32 %v393, %v1948
        %v1950 = vpop.f32.mrb[0].mxu0
        %1951 = vmatprep.mubr.f32.mxu0 0.0
        %1952 = vmatmul.mubr.f32.gmra.mrb[0].mxu0 %v946
        %v1953 = vpop.f32.mrb[0].mxu0
        %v1954 = vadd.f32 %v393, %v1953
        %v1955 = vpop.f32.mrb[0].mxu0
        %1956 = vmatprep.mubr.f32.mxu0 0.0
        %1957 = vmatmul.mubr.f32.gmra.mrb[0].mxu0 %v949
        %v1958 = vpop.f32.mrb[0].mxu0
        %v1959 = vadd.f32 %v393, %v1958
        %v1960 = vpop.f32.mrb[0].mxu0
        %1961 = vmatprep.mubr.f32.mxu0 0.0
        %1962 = vmatmul.mubr.f32.gmra.mrb[0].mxu0 %v952
        %v1963 = vpop.f32.mrb[0].mxu0
        %v1964 = vadd.f32 %v393, %v1963
        %v1965 = vpop.f32.mrb[0].mxu0
        %1966 = vmatprep.mubr.f32.mxu0 0.0
        %1967 = vmatmul.mubr.f32.gmra.mrb[0].mxu0 %v955
        %v1968 = vpop.f32.mrb[0].mxu0
        %v1969 = vadd.f32 %v393, %v1968
        %v1970 = vpop.f32.mrb[0].mxu0
        %1971 = vmatprep.mubr.f32.mxu0 0.0
        %1972 = vmatmul.mubr.f32.gmra.mrb[0].mxu0 %v958
        %v1973 = vpop.f32.mrb[0].mxu0
        %v1974 = vadd.f32 %v393, %v1973
        %v1975 = vpop.f32.mrb[0].mxu0
        %1976 = vmatprep.mubr.f32.mxu0 0.0
        %1977 = vmatmul.mubr.f32.gmra.mrb[0].mxu0 %v961
        %v1978 = vpop.f32.mrb[0].mxu0
        %v1979 = vadd.f32 %v393, %v1978
        %v1980 = vpop.f32.mrb[0].mxu0
        %1981 = vmatprep.mubr.f32.mxu0 0.0
        %1982 = vmatmul.mubr.f32.gmra.mrb[0].mxu0 %v964
        %v1983 = vpop.f32.mrb[0].mxu0
        %v1984 = vadd.f32 %v393, %v1983
        %v1985 = vpop.f32.mrb[0].mxu0
        %1986 = vmatprep.mubr.f32.mxu0 0.0
        %1987 = vmatmul.mubr.f32.gmra.mrb[0].mxu0 %v967
        %v1988 = vpop.f32.mrb[0].mxu0
        %v1989 = vadd.f32 %v393, %v1988
        %v1990 = vpop.f32.mrb[0].mxu0
        %1991 = vmatprep.mubr.f32.mxu0 0.0
        %1992 = vmatmul.mubr.f32.gmra.mrb[0].mxu0 %v970
        %v1993 = vpop.f32.mrb[0].mxu0
        %v1994 = vadd.f32 %v393, %v1993
        %v1995 = vpop.f32.mrb[0].mxu0
        %1996 = vdwg.mxu0
        %v1997 = vmax.f32 %v1039, 0.0
        %v1998 = vmax.f32 %v1044, 0.0
        %v1999 = vmax.f32 %v1049, 0.0
        %v2000 = vmax.f32 %v1054, 0.0
        %v2001 = vmax.f32 %v1059, 0.0
        %v2002 = vmax.f32 %v1064, 0.0
        %v2003 = vmax.f32 %v1069, 0.0
        %v2004 = vmax.f32 %v1074, 0.0
        %v2005 = vmax.f32 %v1079, 0.0
        %v2006 = vmax.f32 %v1084, 0.0
        %v2007 = vmax.f32 %v1089, 0.0
        %v2008 = vmax.f32 %v1094, 0.0
        %v2009 = vmax.f32 %v1099, 0.0
        %v2010 = vmax.f32 %v1104, 0.0
        %v2011 = vmax.f32 %v1109, 0.0
        %v2012 = vmax.f32 %v1114, 0.0
        %v2013 = vmax.f32 %v1119, 0.0
        %v2014 = vmax.f32 %v1124, 0.0
        %v2015 = vmax.f32 %v1129, 0.0
        %v2016 = vmax.f32 %v1134, 0.0
        %v2017 = vmax.f32 %v1139, 0.0
        %v2018 = vmax.f32 %v1144, 0.0
        %v2019 = vmax.f32 %v1149, 0.0
        %v2020 = vmax.f32 %v1154, 0.0
        %v2021 = vmax.f32 %v1159, 0.0
        %v2022 = vmax.f32 %v1164, 0.0
        %v2023 = vmax.f32 %v1169, 0.0
        %v2024 = vmax.f32 %v1174, 0.0
        %v2025 = vmax.f32 %v1179, 0.0
        %v2026 = vmax.f32 %v1184, 0.0
        %v2027 = vmax.f32 %v1189, 0.0
        %v2028 = vmax.f32 %v1194, 0.0
        %v2029 = vmax.f32 %v1199, 0.0
        %v2030 = vmax.f32 %v1204, 0.0
        %v2031 = vmax.f32 %v1209, 0.0
        %v2032 = vmax.f32 %v1214, 0.0
        %v2033 = vmax.f32 %v1219, 0.0
        %v2034 = vmax.f32 %v1224, 0.0
        %v2035 = vmax.f32 %v1229, 0.0
        %v2036 = vmax.f32 %v1234, 0.0
        %v2037 = vmax.f32 %v1239, 0.0
        %v2038 = vmax.f32 %v1244, 0.0
        %v2039 = vmax.f32 %v1249, 0.0
        %v2040 = vmax.f32 %v1254, 0.0
        %v2041 = vmax.f32 %v1259, 0.0
        %v2042 = vmax.f32 %v1264, 0.0
        %v2043 = vmax.f32 %v1269, 0.0
        %v2044 = vmax.f32 %v1274, 0.0
        %v2045 = vmax.f32 %v1279, 0.0
        %v2046 = vmax.f32 %v1284, 0.0
        %v2047 = vmax.f32 %v1289, 0.0
        %v2048 = vmax.f32 %v1294, 0.0
        %v2049 = vmax.f32 %v1299, 0.0
        %v2050 = vmax.f32 %v1304, 0.0
        %v2051 = vmax.f32 %v1309, 0.0
        %v2052 = vmax.f32 %v1314, 0.0
        %v2053 = vmax.f32 %v1319, 0.0
        %v2054 = vmax.f32 %v1324, 0.0
        %v2055 = vmax.f32 %v1329, 0.0
        %v2056 = vmax.f32 %v1334, 0.0
        %v2057 = vmax.f32 %v1339, 0.0
        %v2058 = vmax.f32 %v1344, 0.0
        %v2059 = vmax.f32 %v1349, 0.0
        %v2060 = vmax.f32 %v1354, 0.0
        %v2061 = vmax.f32 %v1359, 0.0
        %v2062 = vmax.f32 %v1364, 0.0
        %v2063 = vmax.f32 %v1369, 0.0
        %v2064 = vmax.f32 %v1374, 0.0
        %v2065 = vmax.f32 %v1379, 0.0
        %v2066 = vmax.f32 %v1384, 0.0
        %v2067 = vmax.f32 %v1389, 0.0
        %v2068 = vmax.f32 %v1394, 0.0
        %v2069 = vmax.f32 %v1399, 0.0
        %v2070 = vmax.f32 %v1404, 0.0
        %v2071 = vmax.f32 %v1409, 0.0
        %v2072 = vmax.f32 %v1414, 0.0
        %v2073 = vmax.f32 %v1419, 0.0
        %v2074 = vmax.f32 %v1424, 0.0
        %v2075 = vmax.f32 %v1429, 0.0
        %v2076 = vmax.f32 %v1434, 0.0
        %v2077 = vmax.f32 %v1439, 0.0
        %v2078 = vmax.f32 %v1444, 0.0
        %v2079 = vmax.f32 %v1449, 0.0
        %v2080 = vmax.f32 %v1454, 0.0
        %v2081 = vmax.f32 %v1459, 0.0
        %v2082 = vmax.f32 %v1464, 0.0
        %v2083 = vmax.f32 %v1469, 0.0
        %v2084 = vmax.f32 %v1474, 0.0
        %v2085 = vmax.f32 %v1479, 0.0
        %v2086 = vmax.f32 %v1484, 0.0
        %v2087 = vmax.f32 %v1489, 0.0
        %v2088 = vmax.f32 %v1494, 0.0
        %v2089 = vmax.f32 %v1499, 0.0
        %v2090 = vmax.f32 %v1504, 0.0
        %v2091 = vmax.f32 %v1509, 0.0
        %v2092 = vmax.f32 %v1514, 0.0
        %v2093 = vmax.f32 %v1519, 0.0
        %v2094 = vmax.f32 %v1524, 0.0
        %v2095 = vmax.f32 %v1529, 0.0
        %v2096 = vmax.f32 %v1534, 0.0
        %v2097 = vmax.f32 %v1539, 0.0
        %v2098 = vmax.f32 %v1544, 0.0
        %v2099 = vmax.f32 %v1549, 0.0
        %v2100 = vmax.f32 %v1554, 0.0
        %v2101 = vmax.f32 %v1559, 0.0
        %v2102 = vmax.f32 %v1564, 0.0
        %v2103 = vmax.f32 %v1569, 0.0
        %v2104 = vmax.f32 %v1574, 0.0
        %v2105 = vmax.f32 %v1579, 0.0
        %v2106 = vmax.f32 %v1584, 0.0
        %v2107 = vmax.f32 %v1589, 0.0
        %v2108 = vmax.f32 %v1594, 0.0
        %v2109 = vmax.f32 %v1599, 0.0
        %v2110 = vmax.f32 %v1604, 0.0
        %v2111 = vmax.f32 %v1609, 0.0
        %v2112 = vmax.f32 %v1614, 0.0
        %v2113 = vmax.f32 %v1619, 0.0
        %v2114 = vmax.f32 %v1624, 0.0
        %v2115 = vmax.f32 %v1629, 0.0
        %v2116 = vmax.f32 %v1634, 0.0
        %v2117 = vmax.f32 %v1639, 0.0
        %v2118 = vmax.f32 %v1644, 0.0
        %v2119 = vmax.f32 %v1649, 0.0
        %v2120 = vmax.f32 %v1654, 0.0
        %v2121 = vmax.f32 %v1659, 0.0
        %v2122 = vmax.f32 %v1664, 0.0
        %v2123 = vmax.f32 %v1669, 0.0
        %v2124 = vmax.f32 %v1674, 0.0
        %v2125 = vmax.f32 %v1679, 0.0
        %v2126 = vmax.f32 %v1684, 0.0
        %v2127 = vmax.f32 %v1689, 0.0
        %v2128 = vmax.f32 %v1694, 0.0
        %v2129 = vmax.f32 %v1699, 0.0
        %v2130 = vmax.f32 %v1704, 0.0
        %v2131 = vmax.f32 %v1709, 0.0
        %v2132 = vmax.f32 %v1714, 0.0
        %v2133 = vmax.f32 %v1719, 0.0
        %v2134 = vmax.f32 %v1724, 0.0
        %v2135 = vmax.f32 %v1729, 0.0
        %v2136 = vmax.f32 %v1734, 0.0
        %v2137 = vmax.f32 %v1739, 0.0
        %v2138 = vmax.f32 %v1744, 0.0
        %v2139 = vmax.f32 %v1749, 0.0
        %v2140 = vmax.f32 %v1754, 0.0
        %v2141 = vmax.f32 %v1759, 0.0
        %v2142 = vmax.f32 %v1764, 0.0
        %v2143 = vmax.f32 %v1769, 0.0
        %v2144 = vmax.f32 %v1774, 0.0
        %v2145 = vmax.f32 %v1779, 0.0
        %v2146 = vmax.f32 %v1784, 0.0
        %v2147 = vmax.f32 %v1789, 0.0
        %v2148 = vmax.f32 %v1794, 0.0
        %v2149 = vmax.f32 %v1799, 0.0
        %v2150 = vmax.f32 %v1804, 0.0
        %v2151 = vmax.f32 %v1809, 0.0
        %v2152 = vmax.f32 %v1814, 0.0
        %v2153 = vmax.f32 %v1819, 0.0
        %v2154 = vmax.f32 %v1824, 0.0
        %v2155 = vmax.f32 %v1829, 0.0
        %v2156 = vmax.f32 %v1834, 0.0
        %v2157 = vmax.f32 %v1839, 0.0
        %v2158 = vmax.f32 %v1844, 0.0
        %v2159 = vmax.f32 %v1849, 0.0
        %v2160 = vmax.f32 %v1854, 0.0
        %v2161 = vmax.f32 %v1859, 0.0
        %v2162 = vmax.f32 %v1864, 0.0
        %v2163 = vmax.f32 %v1869, 0.0
        %v2164 = vmax.f32 %v1874, 0.0
        %v2165 = vmax.f32 %v1879, 0.0
        %v2166 = vmax.f32 %v1884, 0.0
        %v2167 = vmax.f32 %v1889, 0.0
        %v2168 = vmax.f32 %v1894, 0.0
        %v2169 = vmax.f32 %v1899, 0.0
        %v2170 = vmax.f32 %v1904, 0.0
        %v2171 = vmax.f32 %v1909, 0.0
        %v2172 = vmax.f32 %v1914, 0.0
        %v2173 = vmax.f32 %v1919, 0.0
        %v2174 = vmax.f32 %v1924, 0.0
        %v2175 = vmax.f32 %v1929, 0.0
        %v2176 = vmax.f32 %v1934, 0.0
        %v2177 = vmax.f32 %v1939, 0.0
        %v2178 = vmax.f32 %v1944, 0.0
        %v2179 = vmax.f32 %v1949, 0.0
        %v2180 = vmax.f32 %v1954, 0.0
        %v2181 = vmax.f32 %v1959, 0.0
        %v2182 = vmax.f32 %v1964, 0.0
        %v2183 = vmax.f32 %v1969, 0.0
        %v2184 = vmax.f32 %v1974, 0.0
        %v2185 = vmax.f32 %v1979, 0.0
        %v2186 = vmax.f32 %v1984, 0.0
        %v2187 = vmax.f32 %v1989, 0.0
        %v2188 = vmax.f32 %v1994, 0.0
        %vm2189 = vcmask 523264
        %2190 = vst.msk [vmem:[%s172] sm:$0xff] %vm2189, %v1997
        %2191 = vst.msk [vmem:[%s172 + $0x8] sm:$0xff] %vm2189, %v1998
        %2192 = vst.msk [vmem:[%s172 + $0x10] sm:$0xff] %vm2189, %v1999
        %2193 = vst.msk [vmem:[%s172 + $0x18] sm:$0xff] %vm2189, %v2000
        %2194 = vst.msk [vmem:[%s172 + $0x20] sm:$0xff] %vm2189, %v2001
        %2195 = vst.msk [vmem:[%s172 + $0x28] sm:$0xff] %vm2189, %v2002
        %2196 = vst.msk [vmem:[%s172 + $0x30] sm:$0xff] %vm2189, %v2003
        %2197 = vst.msk [vmem:[%s172 + $0x38] sm:$0xff] %vm2189, %v2004
        %2198 = vst.msk [vmem:[%s172 + $0x40] sm:$0xff] %vm2189, %v2005
        %2199 = vst.msk [vmem:[%s172 + $0x48] sm:$0xff] %vm2189, %v2006
        %2200 = vst.msk [vmem:[%s172 + $0x50] sm:$0xff] %vm2189, %v2007
        %2201 = vst.msk [vmem:[%s172 + $0x58] sm:$0xff] %vm2189, %v2008
        %2202 = vst.msk [vmem:[%s172 + $0x60] sm:$0xff] %vm2189, %v2009
        %2203 = vst.msk [vmem:[%s172 + $0x68] sm:$0xff] %vm2189, %v2010
        %2204 = vst.msk [vmem:[%s172 + $0x70] sm:$0xff] %vm2189, %v2011
        %2205 = vst.msk [vmem:[%s172 + $0x78] sm:$0xff] %vm2189, %v2012
        %2206 = vst.msk [vmem:[%s172 + $0x80] sm:$0xff] %vm2189, %v2013
        %2207 = vst.msk [vmem:[%s172 + $0x88] sm:$0xff] %vm2189, %v2014
        %2208 = vst.msk [vmem:[%s172 + $0x90] sm:$0xff] %vm2189, %v2015
        %2209 = vst.msk [vmem:[%s172 + $0x98] sm:$0xff] %vm2189, %v2016
        %2210 = vst.msk [vmem:[%s172 + $0xa0] sm:$0xff] %vm2189, %v2017
        %2211 = vst.msk [vmem:[%s172 + $0xa8] sm:$0xff] %vm2189, %v2018
        %2212 = vst.msk [vmem:[%s172 + $0xb0] sm:$0xff] %vm2189, %v2019
        %2213 = vst.msk [vmem:[%s172 + $0xb8] sm:$0xff] %vm2189, %v2020
        %2214 = vst.msk [vmem:[%s172 + $0xc0] sm:$0xff] %vm2189, %v2021
        %2215 = vst.msk [vmem:[%s172 + $0xc8] sm:$0xff] %vm2189, %v2022
        %2216 = vst.msk [vmem:[%s172 + $0xd0] sm:$0xff] %vm2189, %v2023
        %2217 = vst.msk [vmem:[%s172 + $0xd8] sm:$0xff] %vm2189, %v2024
        %2218 = vst.msk [vmem:[%s172 + $0xe0] sm:$0xff] %vm2189, %v2025
        %2219 = vst.msk [vmem:[%s172 + $0xe8] sm:$0xff] %vm2189, %v2026
        %2220 = vst.msk [vmem:[%s172 + $0xf0] sm:$0xff] %vm2189, %v2027
        %2221 = vst.msk [vmem:[%s172 + $0xf8] sm:$0xff] %vm2189, %v2028
        %2222 = vst.msk [vmem:[%s172 + $0x100] sm:$0xff] %vm2189, %v2029
        %2223 = vst.msk [vmem:[%s172 + $0x108] sm:$0xff] %vm2189, %v2030
        %2224 = vst.msk [vmem:[%s172 + $0x110] sm:$0xff] %vm2189, %v2031
        %2225 = vst.msk [vmem:[%s172 + $0x118] sm:$0xff] %vm2189, %v2032
        %2226 = vst.msk [vmem:[%s172 + $0x120] sm:$0xff] %vm2189, %v2033
        %2227 = vst.msk [vmem:[%s172 + $0x128] sm:$0xff] %vm2189, %v2034
        %2228 = vst.msk [vmem:[%s172 + $0x130] sm:$0xff] %vm2189, %v2035
        %2229 = vst.msk [vmem:[%s172 + $0x138] sm:$0xff] %vm2189, %v2036
        %2230 = vst.msk [vmem:[%s172 + $0x140] sm:$0xff] %vm2189, %v2037
        %2231 = vst.msk [vmem:[%s172 + $0x148] sm:$0xff] %vm2189, %v2038
        %2232 = vst.msk [vmem:[%s172 + $0x150] sm:$0xff] %vm2189, %v2039
        %2233 = vst.msk [vmem:[%s172 + $0x158] sm:$0xff] %vm2189, %v2040
        %2234 = vst.msk [vmem:[%s172 + $0x160] sm:$0xff] %vm2189, %v2041
        %2235 = vst.msk [vmem:[%s172 + $0x168] sm:$0xff] %vm2189, %v2042
        %2236 = vst.msk [vmem:[%s172 + $0x170] sm:$0xff] %vm2189, %v2043
        %2237 = vst.msk [vmem:[%s172 + $0x178] sm:$0xff] %vm2189, %v2044
        %2238 = vst.msk [vmem:[%s172 + $0x180] sm:$0xff] %vm2189, %v2045
        %2239 = vst.msk [vmem:[%s172 + $0x188] sm:$0xff] %vm2189, %v2046
        %2240 = vst.msk [vmem:[%s172 + $0x190] sm:$0xff] %vm2189, %v2047
        %2241 = vst.msk [vmem:[%s172 + $0x198] sm:$0xff] %vm2189, %v2048
        %2242 = vst.msk [vmem:[%s172 + $0x1a0] sm:$0xff] %vm2189, %v2049
        %2243 = vst.msk [vmem:[%s172 + $0x1a8] sm:$0xff] %vm2189, %v2050
        %2244 = vst.msk [vmem:[%s172 + $0x1b0] sm:$0xff] %vm2189, %v2051
        %2245 = vst.msk [vmem:[%s172 + $0x1b8] sm:$0xff] %vm2189, %v2052
        %2246 = vst.msk [vmem:[%s172 + $0x1c0] sm:$0xff] %vm2189, %v2053
        %2247 = vst.msk [vmem:[%s172 + $0x1c8] sm:$0xff] %vm2189, %v2054
        %2248 = vst.msk [vmem:[%s172 + $0x1d0] sm:$0xff] %vm2189, %v2055
        %2249 = vst.msk [vmem:[%s172 + $0x1d8] sm:$0xff] %vm2189, %v2056
        %2250 = vst.msk [vmem:[%s172 + $0x1e0] sm:$0xff] %vm2189, %v2057
        %2251 = vst.msk [vmem:[%s172 + $0x1e8] sm:$0xff] %vm2189, %v2058
        %2252 = vst.msk [vmem:[%s172 + $0x1f0] sm:$0xff] %vm2189, %v2059
        %2253 = vst.msk [vmem:[%s172 + $0x1f8] sm:$0xff] %vm2189, %v2060
        %2254 = vst.msk [vmem:[%s172 + $0x200] sm:$0xff] %vm2189, %v2061
        %2255 = vst.msk [vmem:[%s172 + $0x208] sm:$0xff] %vm2189, %v2062
        %2256 = vst.msk [vmem:[%s172 + $0x210] sm:$0xff] %vm2189, %v2063
        %2257 = vst.msk [vmem:[%s172 + $0x218] sm:$0xff] %vm2189, %v2064
        %2258 = vst.msk [vmem:[%s172 + $0x220] sm:$0xff] %vm2189, %v2065
        %2259 = vst.msk [vmem:[%s172 + $0x228] sm:$0xff] %vm2189, %v2066
        %2260 = vst.msk [vmem:[%s172 + $0x230] sm:$0xff] %vm2189, %v2067
        %2261 = vst.msk [vmem:[%s172 + $0x238] sm:$0xff] %vm2189, %v2068
        %2262 = vst.msk [vmem:[%s172 + $0x240] sm:$0xff] %vm2189, %v2069
        %2263 = vst.msk [vmem:[%s172 + $0x248] sm:$0xff] %vm2189, %v2070
        %2264 = vst.msk [vmem:[%s172 + $0x250] sm:$0xff] %vm2189, %v2071
        %2265 = vst.msk [vmem:[%s172 + $0x258] sm:$0xff] %vm2189, %v2072
        %2266 = vst.msk [vmem:[%s172 + $0x260] sm:$0xff] %vm2189, %v2073
        %2267 = vst.msk [vmem:[%s172 + $0x268] sm:$0xff] %vm2189, %v2074
        %2268 = vst.msk [vmem:[%s172 + $0x270] sm:$0xff] %vm2189, %v2075
        %2269 = vst.msk [vmem:[%s172 + $0x278] sm:$0xff] %vm2189, %v2076
        %2270 = vst.msk [vmem:[%s172 + $0x280] sm:$0xff] %vm2189, %v2077
        %2271 = vst.msk [vmem:[%s172 + $0x288] sm:$0xff] %vm2189, %v2078
        %2272 = vst.msk [vmem:[%s172 + $0x290] sm:$0xff] %vm2189, %v2079
        %2273 = vst.msk [vmem:[%s172 + $0x298] sm:$0xff] %vm2189, %v2080
        %2274 = vst.msk [vmem:[%s172 + $0x2a0] sm:$0xff] %vm2189, %v2081
        %2275 = vst.msk [vmem:[%s172 + $0x2a8] sm:$0xff] %vm2189, %v2082
        %2276 = vst.msk [vmem:[%s172 + $0x2b0] sm:$0xff] %vm2189, %v2083
        %2277 = vst.msk [vmem:[%s172 + $0x2b8] sm:$0xff] %vm2189, %v2084
        %2278 = vst.msk [vmem:[%s172 + $0x2c0] sm:$0xff] %vm2189, %v2085
        %2279 = vst.msk [vmem:[%s172 + $0x2c8] sm:$0xff] %vm2189, %v2086
        %2280 = vst.msk [vmem:[%s172 + $0x2d0] sm:$0xff] %vm2189, %v2087
        %2281 = vst.msk [vmem:[%s172 + $0x2d8] sm:$0xff] %vm2189, %v2088
        %2282 = vst.msk [vmem:[%s172 + $0x2e0] sm:$0xff] %vm2189, %v2089
        %2283 = vst.msk [vmem:[%s172 + $0x2e8] sm:$0xff] %vm2189, %v2090
        %2284 = vst.msk [vmem:[%s172 + $0x2f0] sm:$0xff] %vm2189, %v2091
        %2285 = vst.msk [vmem:[%s172 + $0x2f8] sm:$0xff] %vm2189, %v2092
        %2286 = vst.msk [vmem:[%s172 + $0x300] sm:$0xff] %vm2189, %v2093
        %2287 = vst.msk [vmem:[%s172 + $0x308] sm:$0xff] %vm2189, %v2094
        %2288 = vst.msk [vmem:[%s172 + $0x310] sm:$0xff] %vm2189, %v2095
        %2289 = vst.msk [vmem:[%s172 + $0x318] sm:$0xff] %vm2189, %v2096
        %2290 = vst.msk [vmem:[%s172 + $0x320] sm:$0xff] %vm2189, %v2097
        %2291 = vst.msk [vmem:[%s172 + $0x328] sm:$0xff] %vm2189, %v2098
        %2292 = vst.msk [vmem:[%s172 + $0x330] sm:$0xff] %vm2189, %v2099
        %2293 = vst.msk [vmem:[%s172 + $0x338] sm:$0xff] %vm2189, %v2100
        %2294 = vst.msk [vmem:[%s172 + $0x340] sm:$0xff] %vm2189, %v2101
        %2295 = vst.msk [vmem:[%s172 + $0x348] sm:$0xff] %vm2189, %v2102
        %2296 = vst.msk [vmem:[%s172 + $0x350] sm:$0xff] %vm2189, %v2103
        %2297 = vst.msk [vmem:[%s172 + $0x358] sm:$0xff] %vm2189, %v2104
        %2298 = vst.msk [vmem:[%s172 + $0x360] sm:$0xff] %vm2189, %v2105
        %2299 = vst.msk [vmem:[%s172 + $0x368] sm:$0xff] %vm2189, %v2106
        %2300 = vst.msk [vmem:[%s172 + $0x370] sm:$0xff] %vm2189, %v2107
        %2301 = vst.msk [vmem:[%s172 + $0x378] sm:$0xff] %vm2189, %v2108
        %2302 = vst.msk [vmem:[%s172 + $0x380] sm:$0xff] %vm2189, %v2109
        %2303 = vst.msk [vmem:[%s172 + $0x388] sm:$0xff] %vm2189, %v2110
        %2304 = vst.msk [vmem:[%s172 + $0x390] sm:$0xff] %vm2189, %v2111
        %2305 = vst.msk [vmem:[%s172 + $0x398] sm:$0xff] %vm2189, %v2112
        %2306 = vst.msk [vmem:[%s172 + $0x3a0] sm:$0xff] %vm2189, %v2113
        %2307 = vst.msk [vmem:[%s172 + $0x3a8] sm:$0xff] %vm2189, %v2114
        %2308 = vst.msk [vmem:[%s172 + $0x3b0] sm:$0xff] %vm2189, %v2115
        %2309 = vst.msk [vmem:[%s172 + $0x3b8] sm:$0xff] %vm2189, %v2116
        %2310 = vst.msk [vmem:[%s172 + $0x3c0] sm:$0xff] %vm2189, %v2117
        %2311 = vst.msk [vmem:[%s172 + $0x3c8] sm:$0xff] %vm2189, %v2118
        %2312 = vst.msk [vmem:[%s172 + $0x3d0] sm:$0xff] %vm2189, %v2119
        %2313 = vst.msk [vmem:[%s172 + $0x3d8] sm:$0xff] %vm2189, %v2120
        %2314 = vst.msk [vmem:[%s172 + $0x3e0] sm:$0xff] %vm2189, %v2121
        %2315 = vst.msk [vmem:[%s172 + $0x3e8] sm:$0xff] %vm2189, %v2122
        %2316 = vst.msk [vmem:[%s172 + $0x3f0] sm:$0xff] %vm2189, %v2123
        %2317 = vst.msk [vmem:[%s172 + $0x3f8] sm:$0xff] %vm2189, %v2124
        %2318 = vst.msk [vmem:[%s172 + $0x400] sm:$0xff] %vm2189, %v2125
        %2319 = vst.msk [vmem:[%s172 + $0x408] sm:$0xff] %vm2189, %v2126
        %2320 = vst.msk [vmem:[%s172 + $0x410] sm:$0xff] %vm2189, %v2127
        %2321 = vst.msk [vmem:[%s172 + $0x418] sm:$0xff] %vm2189, %v2128
        %2322 = vst.msk [vmem:[%s172 + $0x420] sm:$0xff] %vm2189, %v2129
        %2323 = vst.msk [vmem:[%s172 + $0x428] sm:$0xff] %vm2189, %v2130
        %2324 = vst.msk [vmem:[%s172 + $0x430] sm:$0xff] %vm2189, %v2131
        %2325 = vst.msk [vmem:[%s172 + $0x438] sm:$0xff] %vm2189, %v2132
        %2326 = vst.msk [vmem:[%s172 + $0x440] sm:$0xff] %vm2189, %v2133
        %2327 = vst.msk [vmem:[%s172 + $0x448] sm:$0xff] %vm2189, %v2134
        %2328 = vst.msk [vmem:[%s172 + $0x450] sm:$0xff] %vm2189, %v2135
        %2329 = vst.msk [vmem:[%s172 + $0x458] sm:$0xff] %vm2189, %v2136
        %2330 = vst.msk [vmem:[%s172 + $0x460] sm:$0xff] %vm2189, %v2137
        %2331 = vst.msk [vmem:[%s172 + $0x468] sm:$0xff] %vm2189, %v2138
        %2332 = vst.msk [vmem:[%s172 + $0x470] sm:$0xff] %vm2189, %v2139
        %2333 = vst.msk [vmem:[%s172 + $0x478] sm:$0xff] %vm2189, %v2140
        %2334 = vst.msk [vmem:[%s172 + $0x480] sm:$0xff] %vm2189, %v2141
        %2335 = vst.msk [vmem:[%s172 + $0x488] sm:$0xff] %vm2189, %v2142
        %2336 = vst.msk [vmem:[%s172 + $0x490] sm:$0xff] %vm2189, %v2143
        %2337 = vst.msk [vmem:[%s172 + $0x498] sm:$0xff] %vm2189, %v2144
        %2338 = vst.msk [vmem:[%s172 + $0x4a0] sm:$0xff] %vm2189, %v2145
        %2339 = vst.msk [vmem:[%s172 + $0x4a8] sm:$0xff] %vm2189, %v2146
        %2340 = vst.msk [vmem:[%s172 + $0x4b0] sm:$0xff] %vm2189, %v2147
        %2341 = vst.msk [vmem:[%s172 + $0x4b8] sm:$0xff] %vm2189, %v2148
        %2342 = vst.msk [vmem:[%s172 + $0x4c0] sm:$0xff] %vm2189, %v2149
        %2343 = vst.msk [vmem:[%s172 + $0x4c8] sm:$0xff] %vm2189, %v2150
        %2344 = vst.msk [vmem:[%s172 + $0x4d0] sm:$0xff] %vm2189, %v2151
        %2345 = vst.msk [vmem:[%s172 + $0x4d8] sm:$0xff] %vm2189, %v2152
        %2346 = vst.msk [vmem:[%s172 + $0x4e0] sm:$0xff] %vm2189, %v2153
        %2347 = vst.msk [vmem:[%s172 + $0x4e8] sm:$0xff] %vm2189, %v2154
        %2348 = vst.msk [vmem:[%s172 + $0x4f0] sm:$0xff] %vm2189, %v2155
        %2349 = vst.msk [vmem:[%s172 + $0x4f8] sm:$0xff] %vm2189, %v2156
        %2350 = vst.msk [vmem:[%s172 + $0x500] sm:$0xff] %vm2189, %v2157
        %2351 = vst.msk [vmem:[%s172 + $0x508] sm:$0xff] %vm2189, %v2158
        %2352 = vst.msk [vmem:[%s172 + $0x510] sm:$0xff] %vm2189, %v2159
        %2353 = vst.msk [vmem:[%s172 + $0x518] sm:$0xff] %vm2189, %v2160
        %2354 = vst.msk [vmem:[%s172 + $0x520] sm:$0xff] %vm2189, %v2161
        %2355 = vst.msk [vmem:[%s172 + $0x528] sm:$0xff] %vm2189, %v2162
        %2356 = vst.msk [vmem:[%s172 + $0x530] sm:$0xff] %vm2189, %v2163
        %2357 = vst.msk [vmem:[%s172 + $0x538] sm:$0xff] %vm2189, %v2164
        %2358 = vst.msk [vmem:[%s172 + $0x540] sm:$0xff] %vm2189, %v2165
        %2359 = vst.msk [vmem:[%s172 + $0x548] sm:$0xff] %vm2189, %v2166
        %2360 = vst.msk [vmem:[%s172 + $0x550] sm:$0xff] %vm2189, %v2167
        %2361 = vst.msk [vmem:[%s172 + $0x558] sm:$0xff] %vm2189, %v2168
        %2362 = vst.msk [vmem:[%s172 + $0x560] sm:$0xff] %vm2189, %v2169
        %2363 = vst.msk [vmem:[%s172 + $0x568] sm:$0xff] %vm2189, %v2170
        %2364 = vst.msk [vmem:[%s172 + $0x570] sm:$0xff] %vm2189, %v2171
        %2365 = vst.msk [vmem:[%s172 + $0x578] sm:$0xff] %vm2189, %v2172
        %2366 = vst.msk [vmem:[%s172 + $0x580] sm:$0xff] %vm2189, %v2173
        %2367 = vst.msk [vmem:[%s172 + $0x588] sm:$0xff] %vm2189, %v2174
        %2368 = vst.msk [vmem:[%s172 + $0x590] sm:$0xff] %vm2189, %v2175
        %2369 = vst.msk [vmem:[%s172 + $0x598] sm:$0xff] %vm2189, %v2176
        %2370 = vst.msk [vmem:[%s172 + $0x5a0] sm:$0xff] %vm2189, %v2177
        %2371 = vst.msk [vmem:[%s172 + $0x5a8] sm:$0xff] %vm2189, %v2178
        %2372 = vst.msk [vmem:[%s172 + $0x5b0] sm:$0xff] %vm2189, %v2179
        %2373 = vst.msk [vmem:[%s172 + $0x5b8] sm:$0xff] %vm2189, %v2180
        %2374 = vst.msk [vmem:[%s172 + $0x5c0] sm:$0xff] %vm2189, %v2181
        %2375 = vst.msk [vmem:[%s172 + $0x5c8] sm:$0xff] %vm2189, %v2182
        %2376 = vst.msk [vmem:[%s172 + $0x5d0] sm:$0xff] %vm2189, %v2183
        %2377 = vst.msk [vmem:[%s172 + $0x5d8] sm:$0xff] %vm2189, %v2184
        %2378 = vst.msk [vmem:[%s172 + $0x5e0] sm:$0xff] %vm2189, %v2185
        %2379 = vst.msk [vmem:[%s172 + $0x5e8] sm:$0xff] %vm2189, %v2186
        %2380 = vst.msk [vmem:[%s172 + $0x5f0] sm:$0xff] %vm2189, %v2187
        %2381 = vst.msk [vmem:[%s172 + $0x5f8] sm:$0xff] %vm2189, %v2188
        %s2382 = sand.u32 %s90, 1
        %s2383 = sand.u32 %s90, 1
        %s2384 = smul.addr %s2383, 1536
        %s2385 = scalar_lea.vmem [#allocation2], %s2384
        // Predicated region
        $region33: #{tpu_custom_call.1} parent=31 // pred_check
          %p2386 = pneg %p100
        $region34: #{tpu_custom_call.1} parent=31 // pred_check_branch
          %2388 = sbr.rel (%p2386) target = $region36
        $region35: #{tpu_custom_call.1} parent=31 // pred_region
          %s2389 = smul.u32 192, %s14
          %s2390 = ssub.s32 375, %s2389
          %p2391 = scmp.lt.s32.totalorder %s2390, 192
          %s2392 = scalar_select %p2391, %s2390, 192
          %s2393 = smul.u32 128, %s2392
          %p2394 = scmp.ne.s32.totalorder 0, %s2393
          %s2395 = smul.addr %s2389, 8
          %s2396 = scalar_lea.vmem %s3, %s2395
          // Predicated region
          $region37: #{tpu_custom_call.1} parent=35 // pred_check
            %p2397 = pneg %p2394
          $region38: #{tpu_custom_call.1} parent=35 // pred_check_branch
            %2399 = sbr.rel (%p2397) target = $region40
          $region39: #{tpu_custom_call.1} parent=35 // pred_region
            // Predicated region
            $region41: #{tpu_custom_call.1} parent=39 // pred_check
              _
            $region42: #{tpu_custom_call.1} parent=39 // pred_check_branch
              %2401 = sbr.rel (0) target = $region44
            $region43: #{tpu_custom_call.1} parent=39 // pred_region
              // Predicated region
              $region63: #{tpu_custom_call.1} parent=43 // pred_check
                _
              $region64: #{tpu_custom_call.1} parent=43 // pred_check_branch
                %2576 = sbr.rel (0) target = $region66
              $region65: #{tpu_custom_call.1} parent=43 // pred_region
                %s2577 = sshrl.u32 %s2392, 6
                // While loop
                $region67: #{tpu_custom_call.1} parent=65 // loop_pre_header
                  _
                $region68: #{tpu_custom_call.1} parent=65 // loop_header
                  %s2579 = sphi 0, %s2581
                  %p2580 = scmp.ge.s32.totalorder %s2579, %s2577
                  %s2584 = sphi 0, %s2717
                  %s2585 = sphi %s2385, %s2720
                  %s2586 = sphi %s2396, %s2721
                $region69: #{tpu_custom_call.1} parent=65 // loop_header_branch
                  %2583 = sbr.rel (%p2580) target = $region73
                $region70: #{tpu_custom_call.1} parent=65 // loop_body
                  %v2587 = vld [vmem:[%s2585] sm:$0xff]
                  %2588 = vst [vmem:[%s2586] sm:$0xff] %v2587
                  %v2589 = vld [vmem:[%s2585 + $0x8] sm:$0xff]
                  %2590 = vst [vmem:[%s2586 + $0x8] sm:$0xff] %v2589
                  %v2591 = vld [vmem:[%s2585 + $0x10] sm:$0xff]
                  %2592 = vst [vmem:[%s2586 + $0x10] sm:$0xff] %v2591
                  %v2593 = vld [vmem:[%s2585 + $0x18] sm:$0xff]
                  %2594 = vst [vmem:[%s2586 + $0x18] sm:$0xff] %v2593
                  %v2595 = vld [vmem:[%s2585 + $0x20] sm:$0xff]
                  %2596 = vst [vmem:[%s2586 + $0x20] sm:$0xff] %v2595
                  %v2597 = vld [vmem:[%s2585 + $0x28] sm:$0xff]
                  %2598 = vst [vmem:[%s2586 + $0x28] sm:$0xff] %v2597
                  %v2599 = vld [vmem:[%s2585 + $0x30] sm:$0xff]
                  %2600 = vst [vmem:[%s2586 + $0x30] sm:$0xff] %v2599
                  %v2601 = vld [vmem:[%s2585 + $0x38] sm:$0xff]
                  %2602 = vst [vmem:[%s2586 + $0x38] sm:$0xff] %v2601
                  %v2603 = vld [vmem:[%s2585 + $0x40] sm:$0xff]
                  %2604 = vst [vmem:[%s2586 + $0x40] sm:$0xff] %v2603
                  %v2605 = vld [vmem:[%s2585 + $0x48] sm:$0xff]
                  %2606 = vst [vmem:[%s2586 + $0x48] sm:$0xff] %v2605
                  %v2607 = vld [vmem:[%s2585 + $0x50] sm:$0xff]
                  %2608 = vst [vmem:[%s2586 + $0x50] sm:$0xff] %v2607
                  %v2609 = vld [vmem:[%s2585 + $0x58] sm:$0xff]
                  %2610 = vst [vmem:[%s2586 + $0x58] sm:$0xff] %v2609
                  %v2611 = vld [vmem:[%s2585 + $0x60] sm:$0xff]
                  %2612 = vst [vmem:[%s2586 + $0x60] sm:$0xff] %v2611
                  %v2613 = vld [vmem:[%s2585 + $0x68] sm:$0xff]
                  %2614 = vst [vmem:[%s2586 + $0x68] sm:$0xff] %v2613
                  %v2615 = vld [vmem:[%s2585 + $0x70] sm:$0xff]
                  %2616 = vst [vmem:[%s2586 + $0x70] sm:$0xff] %v2615
                  %v2617 = vld [vmem:[%s2585 + $0x78] sm:$0xff]
                  %2618 = vst [vmem:[%s2586 + $0x78] sm:$0xff] %v2617
                  %v2619 = vld [vmem:[%s2585 + $0x80] sm:$0xff]
                  %2620 = vst [vmem:[%s2586 + $0x80] sm:$0xff] %v2619
                  %v2621 = vld [vmem:[%s2585 + $0x88] sm:$0xff]
                  %2622 = vst [vmem:[%s2586 + $0x88] sm:$0xff] %v2621
                  %v2623 = vld [vmem:[%s2585 + $0x90] sm:$0xff]
                  %2624 = vst [vmem:[%s2586 + $0x90] sm:$0xff] %v2623
                  %v2625 = vld [vmem:[%s2585 + $0x98] sm:$0xff]
                  %2626 = vst [vmem:[%s2586 + $0x98] sm:$0xff] %v2625
                  %v2627 = vld [vmem:[%s2585 + $0xa0] sm:$0xff]
                  %2628 = vst [vmem:[%s2586 + $0xa0] sm:$0xff] %v2627
                  %v2629 = vld [vmem:[%s2585 + $0xa8] sm:$0xff]
                  %2630 = vst [vmem:[%s2586 + $0xa8] sm:$0xff] %v2629
                  %v2631 = vld [vmem:[%s2585 + $0xb0] sm:$0xff]
                  %2632 = vst [vmem:[%s2586 + $0xb0] sm:$0xff] %v2631
                  %v2633 = vld [vmem:[%s2585 + $0xb8] sm:$0xff]
                  %2634 = vst [vmem:[%s2586 + $0xb8] sm:$0xff] %v2633
                  %v2635 = vld [vmem:[%s2585 + $0xc0] sm:$0xff]
                  %2636 = vst [vmem:[%s2586 + $0xc0] sm:$0xff] %v2635
                  %v2637 = vld [vmem:[%s2585 + $0xc8] sm:$0xff]
                  %2638 = vst [vmem:[%s2586 + $0xc8] sm:$0xff] %v2637
                  %v2639 = vld [vmem:[%s2585 + $0xd0] sm:$0xff]
                  %2640 = vst [vmem:[%s2586 + $0xd0] sm:$0xff] %v2639
                  %v2641 = vld [vmem:[%s2585 + $0xd8] sm:$0xff]
                  %2642 = vst [vmem:[%s2586 + $0xd8] sm:$0xff] %v2641
                  %v2643 = vld [vmem:[%s2585 + $0xe0] sm:$0xff]
                  %2644 = vst [vmem:[%s2586 + $0xe0] sm:$0xff] %v2643
                  %v2645 = vld [vmem:[%s2585 + $0xe8] sm:$0xff]
                  %2646 = vst [vmem:[%s2586 + $0xe8] sm:$0xff] %v2645
                  %v2647 = vld [vmem:[%s2585 + $0xf0] sm:$0xff]
                  %2648 = vst [vmem:[%s2586 + $0xf0] sm:$0xff] %v2647
                  %v2649 = vld [vmem:[%s2585 + $0xf8] sm:$0xff]
                  %2650 = vst [vmem:[%s2586 + $0xf8] sm:$0xff] %v2649
                  %v2651 = vld [vmem:[%s2585 + $0x100] sm:$0xff]
                  %2652 = vst [vmem:[%s2586 + $0x100] sm:$0xff] %v2651
                  %v2653 = vld [vmem:[%s2585 + $0x108] sm:$0xff]
                  %2654 = vst [vmem:[%s2586 + $0x108] sm:$0xff] %v2653
                  %v2655 = vld [vmem:[%s2585 + $0x110] sm:$0xff]
                  %2656 = vst [vmem:[%s2586 + $0x110] sm:$0xff] %v2655
                  %v2657 = vld [vmem:[%s2585 + $0x118] sm:$0xff]
                  %2658 = vst [vmem:[%s2586 + $0x118] sm:$0xff] %v2657
                  %v2659 = vld [vmem:[%s2585 + $0x120] sm:$0xff]
                  %2660 = vst [vmem:[%s2586 + $0x120] sm:$0xff] %v2659
                  %v2661 = vld [vmem:[%s2585 + $0x128] sm:$0xff]
                  %2662 = vst [vmem:[%s2586 + $0x128] sm:$0xff] %v2661
                  %v2663 = vld [vmem:[%s2585 + $0x130] sm:$0xff]
                  %2664 = vst [vmem:[%s2586 + $0x130] sm:$0xff] %v2663
                  %v2665 = vld [vmem:[%s2585 + $0x138] sm:$0xff]
                  %2666 = vst [vmem:[%s2586 + $0x138] sm:$0xff] %v2665
                  %v2667 = vld [vmem:[%s2585 + $0x140] sm:$0xff]
                  %2668 = vst [vmem:[%s2586 + $0x140] sm:$0xff] %v2667
                  %v2669 = vld [vmem:[%s2585 + $0x148] sm:$0xff]
                  %2670 = vst [vmem:[%s2586 + $0x148] sm:$0xff] %v2669
                  %v2671 = vld [vmem:[%s2585 + $0x150] sm:$0xff]
                  %2672 = vst [vmem:[%s2586 + $0x150] sm:$0xff] %v2671
                  %v2673 = vld [vmem:[%s2585 + $0x158] sm:$0xff]
                  %2674 = vst [vmem:[%s2586 + $0x158] sm:$0xff] %v2673
                  %v2675 = vld [vmem:[%s2585 + $0x160] sm:$0xff]
                  %2676 = vst [vmem:[%s2586 + $0x160] sm:$0xff] %v2675
                  %v2677 = vld [vmem:[%s2585 + $0x168] sm:$0xff]
                  %2678 = vst [vmem:[%s2586 + $0x168] sm:$0xff] %v2677
                  %v2679 = vld [vmem:[%s2585 + $0x170] sm:$0xff]
                  %2680 = vst [vmem:[%s2586 + $0x170] sm:$0xff] %v2679
                  %v2681 = vld [vmem:[%s2585 + $0x178] sm:$0xff]
                  %2682 = vst [vmem:[%s2586 + $0x178] sm:$0xff] %v2681
                  %v2683 = vld [vmem:[%s2585 + $0x180] sm:$0xff]
                  %2684 = vst [vmem:[%s2586 + $0x180] sm:$0xff] %v2683
                  %v2685 = vld [vmem:[%s2585 + $0x188] sm:$0xff]
                  %2686 = vst [vmem:[%s2586 + $0x188] sm:$0xff] %v2685
                  %v2687 = vld [vmem:[%s2585 + $0x190] sm:$0xff]
                  %2688 = vst [vmem:[%s2586 + $0x190] sm:$0xff] %v2687
                  %v2689 = vld [vmem:[%s2585 + $0x198] sm:$0xff]
                  %2690 = vst [vmem:[%s2586 + $0x198] sm:$0xff] %v2689
                  %v2691 = vld [vmem:[%s2585 + $0x1a0] sm:$0xff]
                  %2692 = vst [vmem:[%s2586 + $0x1a0] sm:$0xff] %v2691
                  %v2693 = vld [vmem:[%s2585 + $0x1a8] sm:$0xff]
                  %2694 = vst [vmem:[%s2586 + $0x1a8] sm:$0xff] %v2693
                  %v2695 = vld [vmem:[%s2585 + $0x1b0] sm:$0xff]
                  %2696 = vst [vmem:[%s2586 + $0x1b0] sm:$0xff] %v2695
                  %v2697 = vld [vmem:[%s2585 + $0x1b8] sm:$0xff]
                  %2698 = vst [vmem:[%s2586 + $0x1b8] sm:$0xff] %v2697
                  %v2699 = vld [vmem:[%s2585 + $0x1c0] sm:$0xff]
                  %2700 = vst [vmem:[%s2586 + $0x1c0] sm:$0xff] %v2699
                  %v2701 = vld [vmem:[%s2585 + $0x1c8] sm:$0xff]
                  %2702 = vst [vmem:[%s2586 + $0x1c8] sm:$0xff] %v2701
                  %v2703 = vld [vmem:[%s2585 + $0x1d0] sm:$0xff]
                  %2704 = vst [vmem:[%s2586 + $0x1d0] sm:$0xff] %v2703
                  %v2705 = vld [vmem:[%s2585 + $0x1d8] sm:$0xff]
                  %2706 = vst [vmem:[%s2586 + $0x1d8] sm:$0xff] %v2705
                  %v2707 = vld [vmem:[%s2585 + $0x1e0] sm:$0xff]
                  %2708 = vst [vmem:[%s2586 + $0x1e0] sm:$0xff] %v2707
                  %v2709 = vld [vmem:[%s2585 + $0x1e8] sm:$0xff]
                  %2710 = vst [vmem:[%s2586 + $0x1e8] sm:$0xff] %v2709
                  %v2711 = vld [vmem:[%s2585 + $0x1f0] sm:$0xff]
                  %2712 = vst [vmem:[%s2586 + $0x1f0] sm:$0xff] %v2711
                  %v2713 = vld [vmem:[%s2585 + $0x1f8] sm:$0xff]
                  %2714 = vst [vmem:[%s2586 + $0x1f8] sm:$0xff] %v2713
                  %s2715 = sadd.s32 1, %s2584
                  %p2716 = scmp.ge.s32.totalorder %s2715, %s2577
                  %s2717 = scalar_select %p2716, 0, %s2715
                  %s2718 = smul.u32 %s2717, 512
                  %s2719 = smul.u32 %s2717, 512
                  %s2720 = scalar_lea.vmem %s2385, %s2718 [#allocation2]
                  %s2721 = scalar_lea.vmem %s2396, %s2719
                $region71: #{tpu_custom_call.1} parent=65 // loop_footer
                  %s2581 = sadd.s32 %s2579, 1
                $region72: #{tpu_custom_call.1} parent=65 // loop_footer_branch
                  %2578 = sbr.rel target = $region68
                $region73: #{tpu_custom_call.1} parent=65 // loop_exit
                  _
                %s2722 = sshrl.u32 %s2392, 6
                %s2723 = sand.u32 %s2392, 63
                %s2724 = smul.u32 %s2722, 64
                %s2725 = smul.u32 8, %s2724
                %s2726 = scalar_lea.vmem %s2385, %s2725 [#allocation2]
                %s2727 = smul.u32 8, %s2724
                %s2728 = scalar_lea.vmem %s2396, %s2727
                // While loop
                $region74: #{tpu_custom_call.1} parent=65 // loop_pre_header
                  _
                $region75: #{tpu_custom_call.1} parent=65 // loop_header
                  %s2730 = sphi 0, %s2732
                  %p2731 = scmp.ge.s32.totalorder %s2730, %s2723
                  %s2735 = sphi 0, %s2742
                  %s2736 = sphi %s2726, %s2745
                  %s2737 = sphi %s2728, %s2746
                $region76: #{tpu_custom_call.1} parent=65 // loop_header_branch
                  %2734 = sbr.rel (%p2731) target = $region80
                $region77: #{tpu_custom_call.1} parent=65 // loop_body
                  %v2738 = vld [vmem:[%s2736] sm:$0xff]
                  %2739 = vst [vmem:[%s2737] sm:$0xff] %v2738
                  %s2740 = sadd.s32 1, %s2735
                  %p2741 = scmp.ge.s32.totalorder %s2740, %s2723
                  %s2742 = scalar_select %p2741, 0, %s2740
                  %s2743 = smul.u32 %s2742, 8
                  %s2744 = smul.u32 %s2742, 8
                  %s2745 = scalar_lea.vmem %s2726, %s2743 [#allocation2]
                  %s2746 = scalar_lea.vmem %s2728, %s2744
                $region78: #{tpu_custom_call.1} parent=65 // loop_footer
                  %s2732 = sadd.s32 %s2730, 1
                $region79: #{tpu_custom_call.1} parent=65 // loop_footer_branch
                  %2729 = sbr.rel target = $region75
                $region80: #{tpu_custom_call.1} parent=65 // loop_exit
                  _
              $region66: #{tpu_custom_call.1} parent=43 // pred_fallthru
                _
              // Predicated region
              $region81: #{tpu_custom_call.1} parent=43 // pred_check
                _
              $region82: #{tpu_custom_call.1} parent=43 // pred_check_branch
                %2748 = sbr.rel target = $region84
              $region83: #{tpu_custom_call.1} parent=43 // pred_region
                _
              $region84: #{tpu_custom_call.1} parent=43 // pred_fallthru
                _
            $region44: #{tpu_custom_call.1} parent=39 // pred_fallthru
              _
            // Predicated region
            $region45: #{tpu_custom_call.1} parent=39 // pred_check
              _
            $region46: #{tpu_custom_call.1} parent=39 // pred_check_branch
              %2403 = sbr.rel target = $region48
            $region47: #{tpu_custom_call.1} parent=39 // pred_region
              %s2405 = sshrl.u32 %s2392, 6
              // While loop
              $region49: #{tpu_custom_call.1} parent=47 // loop_pre_header
                _
              $region50: #{tpu_custom_call.1} parent=47 // loop_header
                %s2407 = sphi 0, %s2409
                %p2408 = scmp.ge.s32.totalorder %s2407, %s2405
                %s2412 = sphi 0, %s2545
                %s2413 = sphi %s2385, %s2548
                %s2414 = sphi %s2396, %s2549
              $region51: #{tpu_custom_call.1} parent=47 // loop_header_branch
                %2411 = sbr.rel (%p2408) target = $region55
              $region52: #{tpu_custom_call.1} parent=47 // loop_body
                %v2415 = vld [vmem:[%s2413] sm:$0xff]
                %2416 = vst [vmem:[%s2414] sm:$0xff] %v2415
                %v2417 = vld [vmem:[%s2413 + $0x8] sm:$0xff]
                %2418 = vst [vmem:[%s2414 + $0x8] sm:$0xff] %v2417
                %v2419 = vld [vmem:[%s2413 + $0x10] sm:$0xff]
                %2420 = vst [vmem:[%s2414 + $0x10] sm:$0xff] %v2419
                %v2421 = vld [vmem:[%s2413 + $0x18] sm:$0xff]
                %2422 = vst [vmem:[%s2414 + $0x18] sm:$0xff] %v2421
                %v2423 = vld [vmem:[%s2413 + $0x20] sm:$0xff]
                %2424 = vst [vmem:[%s2414 + $0x20] sm:$0xff] %v2423
                %v2425 = vld [vmem:[%s2413 + $0x28] sm:$0xff]
                %2426 = vst [vmem:[%s2414 + $0x28] sm:$0xff] %v2425
                %v2427 = vld [vmem:[%s2413 + $0x30] sm:$0xff]
                %2428 = vst [vmem:[%s2414 + $0x30] sm:$0xff] %v2427
                %v2429 = vld [vmem:[%s2413 + $0x38] sm:$0xff]
                %2430 = vst [vmem:[%s2414 + $0x38] sm:$0xff] %v2429
                %v2431 = vld [vmem:[%s2413 + $0x40] sm:$0xff]
                %2432 = vst [vmem:[%s2414 + $0x40] sm:$0xff] %v2431
                %v2433 = vld [vmem:[%s2413 + $0x48] sm:$0xff]
                %2434 = vst [vmem:[%s2414 + $0x48] sm:$0xff] %v2433
                %v2435 = vld [vmem:[%s2413 + $0x50] sm:$0xff]
                %2436 = vst [vmem:[%s2414 + $0x50] sm:$0xff] %v2435
                %v2437 = vld [vmem:[%s2413 + $0x58] sm:$0xff]
                %2438 = vst [vmem:[%s2414 + $0x58] sm:$0xff] %v2437
                %v2439 = vld [vmem:[%s2413 + $0x60] sm:$0xff]
                %2440 = vst [vmem:[%s2414 + $0x60] sm:$0xff] %v2439
                %v2441 = vld [vmem:[%s2413 + $0x68] sm:$0xff]
                %2442 = vst [vmem:[%s2414 + $0x68] sm:$0xff] %v2441
                %v2443 = vld [vmem:[%s2413 + $0x70] sm:$0xff]
                %2444 = vst [vmem:[%s2414 + $0x70] sm:$0xff] %v2443
                %v2445 = vld [vmem:[%s2413 + $0x78] sm:$0xff]
                %2446 = vst [vmem:[%s2414 + $0x78] sm:$0xff] %v2445
                %v2447 = vld [vmem:[%s2413 + $0x80] sm:$0xff]
                %2448 = vst [vmem:[%s2414 + $0x80] sm:$0xff] %v2447
                %v2449 = vld [vmem:[%s2413 + $0x88] sm:$0xff]
                %2450 = vst [vmem:[%s2414 + $0x88] sm:$0xff] %v2449
                %v2451 = vld [vmem:[%s2413 + $0x90] sm:$0xff]
                %2452 = vst [vmem:[%s2414 + $0x90] sm:$0xff] %v2451
                %v2453 = vld [vmem:[%s2413 + $0x98] sm:$0xff]
                %2454 = vst [vmem:[%s2414 + $0x98] sm:$0xff] %v2453
                %v2455 = vld [vmem:[%s2413 + $0xa0] sm:$0xff]
                %2456 = vst [vmem:[%s2414 + $0xa0] sm:$0xff] %v2455
                %v2457 = vld [vmem:[%s2413 + $0xa8] sm:$0xff]
                %2458 = vst [vmem:[%s2414 + $0xa8] sm:$0xff] %v2457
                %v2459 = vld [vmem:[%s2413 + $0xb0] sm:$0xff]
                %2460 = vst [vmem:[%s2414 + $0xb0] sm:$0xff] %v2459
                %v2461 = vld [vmem:[%s2413 + $0xb8] sm:$0xff]
                %2462 = vst [vmem:[%s2414 + $0xb8] sm:$0xff] %v2461
                %v2463 = vld [vmem:[%s2413 + $0xc0] sm:$0xff]
                %2464 = vst [vmem:[%s2414 + $0xc0] sm:$0xff] %v2463
                %v2465 = vld [vmem:[%s2413 + $0xc8] sm:$0xff]
                %2466 = vst [vmem:[%s2414 + $0xc8] sm:$0xff] %v2465
                %v2467 = vld [vmem:[%s2413 + $0xd0] sm:$0xff]
                %2468 = vst [vmem:[%s2414 + $0xd0] sm:$0xff] %v2467
                %v2469 = vld [vmem:[%s2413 + $0xd8] sm:$0xff]
                %2470 = vst [vmem:[%s2414 + $0xd8] sm:$0xff] %v2469
                %v2471 = vld [vmem:[%s2413 + $0xe0] sm:$0xff]
                %2472 = vst [vmem:[%s2414 + $0xe0] sm:$0xff] %v2471
                %v2473 = vld [vmem:[%s2413 + $0xe8] sm:$0xff]
                %2474 = vst [vmem:[%s2414 + $0xe8] sm:$0xff] %v2473
                %v2475 = vld [vmem:[%s2413 + $0xf0] sm:$0xff]
                %2476 = vst [vmem:[%s2414 + $0xf0] sm:$0xff] %v2475
                %v2477 = vld [vmem:[%s2413 + $0xf8] sm:$0xff]
                %2478 = vst [vmem:[%s2414 + $0xf8] sm:$0xff] %v2477
                %v2479 = vld [vmem:[%s2413 + $0x100] sm:$0xff]
                %2480 = vst [vmem:[%s2414 + $0x100] sm:$0xff] %v2479
                %v2481 = vld [vmem:[%s2413 + $0x108] sm:$0xff]
                %2482 = vst [vmem:[%s2414 + $0x108] sm:$0xff] %v2481
                %v2483 = vld [vmem:[%s2413 + $0x110] sm:$0xff]
                %2484 = vst [vmem:[%s2414 + $0x110] sm:$0xff] %v2483
                %v2485 = vld [vmem:[%s2413 + $0x118] sm:$0xff]
                %2486 = vst [vmem:[%s2414 + $0x118] sm:$0xff] %v2485
                %v2487 = vld [vmem:[%s2413 + $0x120] sm:$0xff]
                %2488 = vst [vmem:[%s2414 + $0x120] sm:$0xff] %v2487
                %v2489 = vld [vmem:[%s2413 + $0x128] sm:$0xff]
                %2490 = vst [vmem:[%s2414 + $0x128] sm:$0xff] %v2489
                %v2491 = vld [vmem:[%s2413 + $0x130] sm:$0xff]
                %2492 = vst [vmem:[%s2414 + $0x130] sm:$0xff] %v2491
                %v2493 = vld [vmem:[%s2413 + $0x138] sm:$0xff]
                %2494 = vst [vmem:[%s2414 + $0x138] sm:$0xff] %v2493
                %v2495 = vld [vmem:[%s2413 + $0x140] sm:$0xff]
                %2496 = vst [vmem:[%s2414 + $0x140] sm:$0xff] %v2495
                %v2497 = vld [vmem:[%s2413 + $0x148] sm:$0xff]
                %2498 = vst [vmem:[%s2414 + $0x148] sm:$0xff] %v2497
                %v2499 = vld [vmem:[%s2413 + $0x150] sm:$0xff]
                %2500 = vst [vmem:[%s2414 + $0x150] sm:$0xff] %v2499
                %v2501 = vld [vmem:[%s2413 + $0x158] sm:$0xff]
                %2502 = vst [vmem:[%s2414 + $0x158] sm:$0xff] %v2501
                %v2503 = vld [vmem:[%s2413 + $0x160] sm:$0xff]
                %2504 = vst [vmem:[%s2414 + $0x160] sm:$0xff] %v2503
                %v2505 = vld [vmem:[%s2413 + $0x168] sm:$0xff]
                %2506 = vst [vmem:[%s2414 + $0x168] sm:$0xff] %v2505
                %v2507 = vld [vmem:[%s2413 + $0x170] sm:$0xff]
                %2508 = vst [vmem:[%s2414 + $0x170] sm:$0xff] %v2507
                %v2509 = vld [vmem:[%s2413 + $0x178] sm:$0xff]
                %2510 = vst [vmem:[%s2414 + $0x178] sm:$0xff] %v2509
                %v2511 = vld [vmem:[%s2413 + $0x180] sm:$0xff]
                %2512 = vst [vmem:[%s2414 + $0x180] sm:$0xff] %v2511
                %v2513 = vld [vmem:[%s2413 + $0x188] sm:$0xff]
                %2514 = vst [vmem:[%s2414 + $0x188] sm:$0xff] %v2513
                %v2515 = vld [vmem:[%s2413 + $0x190] sm:$0xff]
                %2516 = vst [vmem:[%s2414 + $0x190] sm:$0xff] %v2515
                %v2517 = vld [vmem:[%s2413 + $0x198] sm:$0xff]
                %2518 = vst [vmem:[%s2414 + $0x198] sm:$0xff] %v2517
                %v2519 = vld [vmem:[%s2413 + $0x1a0] sm:$0xff]
                %2520 = vst [vmem:[%s2414 + $0x1a0] sm:$0xff] %v2519
                %v2521 = vld [vmem:[%s2413 + $0x1a8] sm:$0xff]
                %2522 = vst [vmem:[%s2414 + $0x1a8] sm:$0xff] %v2521
                %v2523 = vld [vmem:[%s2413 + $0x1b0] sm:$0xff]
                %2524 = vst [vmem:[%s2414 + $0x1b0] sm:$0xff] %v2523
                %v2525 = vld [vmem:[%s2413 + $0x1b8] sm:$0xff]
                %2526 = vst [vmem:[%s2414 + $0x1b8] sm:$0xff] %v2525
                %v2527 = vld [vmem:[%s2413 + $0x1c0] sm:$0xff]
                %2528 = vst [vmem:[%s2414 + $0x1c0] sm:$0xff] %v2527
                %v2529 = vld [vmem:[%s2413 + $0x1c8] sm:$0xff]
                %2530 = vst [vmem:[%s2414 + $0x1c8] sm:$0xff] %v2529
                %v2531 = vld [vmem:[%s2413 + $0x1d0] sm:$0xff]
                %2532 = vst [vmem:[%s2414 + $0x1d0] sm:$0xff] %v2531
                %v2533 = vld [vmem:[%s2413 + $0x1d8] sm:$0xff]
                %2534 = vst [vmem:[%s2414 + $0x1d8] sm:$0xff] %v2533
                %v2535 = vld [vmem:[%s2413 + $0x1e0] sm:$0xff]
                %2536 = vst [vmem:[%s2414 + $0x1e0] sm:$0xff] %v2535
                %v2537 = vld [vmem:[%s2413 + $0x1e8] sm:$0xff]
                %2538 = vst [vmem:[%s2414 + $0x1e8] sm:$0xff] %v2537
                %v2539 = vld [vmem:[%s2413 + $0x1f0] sm:$0xff]
                %2540 = vst [vmem:[%s2414 + $0x1f0] sm:$0xff] %v2539
                %v2541 = vld [vmem:[%s2413 + $0x1f8] sm:$0xff]
                %2542 = vst [vmem:[%s2414 + $0x1f8] sm:$0xff] %v2541
                %s2543 = sadd.s32 1, %s2412
                %p2544 = scmp.ge.s32.totalorder %s2543, %s2405
                %s2545 = scalar_select %p2544, 0, %s2543
                %s2546 = smul.u32 %s2545, 512
                %s2547 = smul.u32 %s2545, 512
                %s2548 = scalar_lea.vmem %s2385, %s2546 [#allocation2]
                %s2549 = scalar_lea.vmem %s2396, %s2547
              $region53: #{tpu_custom_call.1} parent=47 // loop_footer
                %s2409 = sadd.s32 %s2407, 1
              $region54: #{tpu_custom_call.1} parent=47 // loop_footer_branch
                %2406 = sbr.rel target = $region50
              $region55: #{tpu_custom_call.1} parent=47 // loop_exit
                _
              %s2550 = sshrl.u32 %s2392, 6
              %s2551 = sand.u32 %s2392, 63
              %s2552 = smul.u32 %s2550, 64
              %s2553 = smul.u32 8, %s2552
              %s2554 = scalar_lea.vmem %s2385, %s2553 [#allocation2]
              %s2555 = smul.u32 8, %s2552
              %s2556 = scalar_lea.vmem %s2396, %s2555
              // While loop
              $region56: #{tpu_custom_call.1} parent=47 // loop_pre_header
                _
              $region57: #{tpu_custom_call.1} parent=47 // loop_header
                %s2558 = sphi 0, %s2560
                %p2559 = scmp.ge.s32.totalorder %s2558, %s2551
                %s2563 = sphi 0, %s2570
                %s2564 = sphi %s2554, %s2573
                %s2565 = sphi %s2556, %s2574
              $region58: #{tpu_custom_call.1} parent=47 // loop_header_branch
                %2562 = sbr.rel (%p2559) target = $region62
              $region59: #{tpu_custom_call.1} parent=47 // loop_body
                %v2566 = vld [vmem:[%s2564] sm:$0xff]
                %2567 = vst [vmem:[%s2565] sm:$0xff] %v2566
                %s2568 = sadd.s32 1, %s2563
                %p2569 = scmp.ge.s32.totalorder %s2568, %s2551
                %s2570 = scalar_select %p2569, 0, %s2568
                %s2571 = smul.u32 %s2570, 8
                %s2572 = smul.u32 %s2570, 8
                %s2573 = scalar_lea.vmem %s2554, %s2571 [#allocation2]
                %s2574 = scalar_lea.vmem %s2556, %s2572
              $region60: #{tpu_custom_call.1} parent=47 // loop_footer
                %s2560 = sadd.s32 %s2558, 1
              $region61: #{tpu_custom_call.1} parent=47 // loop_footer_branch
                %2557 = sbr.rel target = $region57
              $region62: #{tpu_custom_call.1} parent=47 // loop_exit
                _
            $region48: #{tpu_custom_call.1} parent=39 // pred_fallthru
              _
          $region40: #{tpu_custom_call.1} parent=35 // pred_fallthru
            _
          %2749 = vnop
        $region36: #{tpu_custom_call.1} parent=31 // pred_fallthru
          _
      $region32: #{tpu_custom_call.1} parent=5 // pred_fallthru
        _
      %p2750 = scmp.le.s32.totalorder 2, %s9
      // Predicated region
      $region85: #{tpu_custom_call.1} parent=5 // pred_check
        %p2751 = pneg %p2750
      $region86: #{tpu_custom_call.1} parent=5 // pred_check_branch
        %2753 = sbr.rel (%p2751) target = $region88
      $region87: #{tpu_custom_call.1} parent=5 // pred_region
        %s2754 = ssub.s32 %s9, 2
        // Predicated region
        $region89: #{tpu_custom_call.1} parent=87 // pred_check
          %p2755 = pneg %p106
        $region90: #{tpu_custom_call.1} parent=87 // pred_check_branch
          %2757 = sbr.rel (%p2755) target = $region92
        $region91: #{tpu_custom_call.1} parent=87 // pred_region
          %s2758 = sand.u32 %s91, 1
          %s2759 = sand.u32 %s91, 1
          %s2760 = smul.addr %s2759, 1536
          %s2761 = scalar_lea.vmem [#allocation2], %s2760
        $region92: #{tpu_custom_call.1} parent=87 // pred_fallthru
          _
      $region88: #{tpu_custom_call.1} parent=5 // pred_fallthru
        _
    $region6: #{tpu_custom_call.1} parent=1 // loop_footer
      %s13 = sadd.s32 1, %s9
    $region7: #{tpu_custom_call.1} parent=1 // loop_footer_branch
      %8 = sbr.rel target = $region3
    $region8: #{tpu_custom_call.1} parent=1 // loop_exit
      _

</llo_original>
